<compile_context>
chip_gen: v7x
topology: tpu7x:2x2x1
jax: 0.10.0
libtpu: 0.0.40
codegen_flags: <defaults>
</compile_context>

<pallas_src>
import jax
import jax.numpy as jnp
from jax.experimental import pallas as pl
from jax.experimental.pallas import tpu as pltpu

HIDDEN_SIZE = 64
INPUT_SIZE = 1
OUTPUT_SIZE = 1

ROWS = 8              # sublanes of the batch slab
LANE = 128
CHUNK_COLS = 512      # inner vreg-friendly chunk: (8, 512) f32 = 4 vregs
MAX_TILE_COLS = 4096  # up to 8*4096 = 32768 batch elements per grid step (128 KiB tile)


def mlp_kernel(p_ref, x_ref, o_ref):
    # p_ref: SMEM (193,) f32: [0:64]=fc1.weight[:,0], [64:128]=fc1.bias,
    #        [128:192]=fc2.weight[0,:], [192]=fc2.bias
    # x_ref / o_ref: VMEM (ROWS, tile_cols) f32, batch on sublanes + lanes.
    tile_cols = x_ref.shape[1]
    chunk = min(CHUNK_COLS, tile_cols)          # wrapper guarantees tile_cols % chunk == 0
    n_chunks = tile_cols // chunk

    def chunk_body(c, carry):
        off = pl.multiple_of(c * chunk, chunk)
        x = x_ref[:, pl.ds(off, chunk)]                                   # (8, chunk)
        acc = jnp.full((ROWS, chunk), p_ref[3 * HIDDEN_SIZE], jnp.float32)  # fc2 bias
        for j in range(HIDDEN_SIZE):                                      # unrolled at trace time
            h = jnp.maximum(p_ref[j] * x + p_ref[HIDDEN_SIZE + j], 0.0)   # fc1 + ReLU
            acc = acc + p_ref[2 * HIDDEN_SIZE + j] * h                    # fc2 accumulate
        o_ref[:, pl.ds(off, chunk)] = acc
        return carry

    jax.lax.fori_loop(0, n_chunks, chunk_body, 0)


def _round_up(n, m):
    return ((n + m - 1) // m) * m


def simple_model_forward(x, w1, b1, w2, b2, *, tile_cols=None):
    """x: (B, 1); w1: (64, 1); b1: (64,); w2: (1, 64); b2: (1,)  (PyTorch layouts)."""
    B = x.shape[0]
    cols_total = pl.cdiv(B, ROWS)                  # lane-columns needed for the batch

    if tile_cols is None:
        if cols_total <= CHUNK_COLS:
            # Small batch: one small tile, no over-compute.
            tile_cols = max(LANE, _round_up(cols_total, LANE))
        else:
            # Big batch: >= 2 blocks so both v7x TensorCores get work; cap the tile
            # at (8, 4096) f32 = 128 KiB (comfortable on every generation's VMEM).
            tile_cols = min(MAX_TILE_COLS, _round_up(pl.cdiv(cols_total, 2), CHUNK_COLS))
    assert tile_cols % LANE == 0
    assert tile_cols % min(CHUNK_COLS, tile_cols) == 0

    n_tiles = pl.cdiv(cols_total, tile_cols)
    cols_padded = n_tiles * tile_cols
    Bp = ROWS * cols_padded

    # Glue kept minimal: one cast+pad+reshape in, one slice+reshape out.
    xf = jnp.pad(x.reshape(-1).astype(jnp.float32), (0, Bp - B)).reshape(ROWS, cols_padded)

    params = jnp.concatenate([
        w1.reshape(-1).astype(jnp.float32),        # (64,) fc1 weight column
        b1.reshape(-1).astype(jnp.float32),        # (64,) fc1 bias
        w2.reshape(-1).astype(jnp.float32),        # (64,) fc2 weight row
        b2.reshape(-1).astype(jnp.float32),        # (1,)  fc2 bias
    ])                                             # (193,) -> single SMEM-resident array

    out2d = pl.pallas_call(
        mlp_kernel,
        out_shape=jax.ShapeDtypeStruct((ROWS, cols_padded), jnp.float32),
        grid=(n_tiles,),
        in_specs=[
            pl.BlockSpec(memory_space=pltpu.MemorySpace.SMEM),        # packed params
            pl.BlockSpec((ROWS, tile_cols), lambda i: (0, i)),        # batch slab tile
        ],
        out_specs=pl.BlockSpec((ROWS, tile_cols), lambda i: (0, i)),  # dense output tile
        compiler_params=pltpu.CompilerParams(
            dimension_semantics=("parallel",),
        ),
    )(params, xf)

    # Padded positions hold relu(b1)·w2 + b2 garbage; the [:B] slice drops them.
    return out2d.reshape(-1)[:B].reshape(B, OUTPUT_SIZE)


def reference_forward(x, w1, b1, w2, b2):
    h = jnp.maximum(x @ w1.T + b1, 0.0)
    return h @ w2.T + b2


if __name__ == "__main__":
    key = jax.random.PRNGKey(0)
    kx, k1, k2, k3, k4 = jax.random.split(key, 5)

    batch = 8
    x = jax.random.normal(kx, (batch, INPUT_SIZE), dtype=jnp.float32)

    # Deterministic parameter init (uniform like PyTorch's default Linear init).
    bound1 = 1.0 / (INPUT_SIZE ** 0.5)
    w1 = jax.random.uniform(k1, (HIDDEN_SIZE, INPUT_SIZE), jnp.float32, -bound1, bound1)
    b1 = jax.random.uniform(k2, (HIDDEN_SIZE,), jnp.float32, -bound1, bound1)
    bound2 = 1.0 / (HIDDEN_SIZE ** 0.5)
    w2 = jax.random.uniform(k3, (OUTPUT_SIZE, HIDDEN_SIZE), jnp.float32, -bound2, bound2)
    b2 = jax.random.uniform(k4, (OUTPUT_SIZE,), jnp.float32, -bound2, bound2)

    out = jax.block_until_ready(simple_model_forward(x, w1, b1, w2, b2))
    ref = reference_forward(x, w1, b1, w2, b2)
    assert out.shape == (batch, OUTPUT_SIZE)
    assert jnp.allclose(out, ref, atol=1e-5, rtol=1e-5)

    # Exercise the multi-tile (grid > 1) + padding path once.
    xb = jax.random.normal(kx, (5000, INPUT_SIZE), dtype=jnp.float32)
    outb = jax.block_until_ready(simple_model_forward(xb, w1, b1, w2, b2))
    refb = reference_forward(xb, w1, b1, w2, b2)
    assert jnp.allclose(outb, refb, atol=1e-5, rtol=1e-5)

    print("KERNEL_OK")
</pallas_src>

<mosaic_0001>
module attributes {stable_mosaic.version = 11 : i64} {
  func.func @mlp_kernel(%arg0: i32, %arg1: memref<193xf32, #tpu.memory_space<smem>>, %arg2: memref<8x128xf32, #tpu.memory_space<vmem>>, %arg3: memref<8x128xf32, #tpu.memory_space<vmem>>) attributes {dimension_semantics = [#tpu.dimension_semantics<parallel>], iteration_bounds = array<i64: 1>, scalar_prefetch = 0 : i64, scratch_operands = 0 : i64, tpu.core_type = #tpu.core_type<tc>, window_params = [{transform_indices = @transform_0, window_bounds = array<i64: 193>}, {transform_indices = @transform_1, window_bounds = array<i64: 8, 128>}, {transform_indices = @transform_2, window_bounds = array<i64: 8, 128>}]} {
    %c0_i32 = arith.constant 0 : i32
    %c128_i32 = arith.constant 128 : i32
    %0 = arith.muli %c0_i32, %c128_i32 : i32
    %1 = tpu.assume_multiple %0, 128 : i32
    %c0 = arith.constant 0 : index
    %2 = arith.index_cast %1 : i32 to index
    %3 = vector.load %arg2[%c0, %2] : memref<8x128xf32, #tpu.memory_space<vmem>>, vector<8x128xf32>
    %c192 = arith.constant 192 : index
    %4 = memref.load %arg1[%c192] : memref<193xf32, #tpu.memory_space<smem>>
    %5 = vector.broadcast %4 : f32 to vector<8x128xf32>
    %c0_0 = arith.constant 0 : index
    %6 = memref.load %arg1[%c0_0] : memref<193xf32, #tpu.memory_space<smem>>
    %7 = vector.broadcast %6 : f32 to vector<8x128xf32>
    %8 = arith.mulf %7, %3 : vector<8x128xf32>
    %c64 = arith.constant 64 : index
    %9 = memref.load %arg1[%c64] : memref<193xf32, #tpu.memory_space<smem>>
    %10 = vector.broadcast %9 : f32 to vector<8x128xf32>
    %11 = arith.addf %8, %10 : vector<8x128xf32>
    %cst = arith.constant 0.000000e+00 : f32
    %12 = vector.broadcast %cst : f32 to vector<8x128xf32>
    %13 = arith.maximumf %11, %12 : vector<8x128xf32>
    %c128 = arith.constant 128 : index
    %14 = memref.load %arg1[%c128] : memref<193xf32, #tpu.memory_space<smem>>
    %15 = vector.broadcast %14 : f32 to vector<8x128xf32>
    %16 = arith.mulf %15, %13 : vector<8x128xf32>
    %17 = arith.addf %5, %16 : vector<8x128xf32>
    %c1 = arith.constant 1 : index
    %18 = memref.load %arg1[%c1] : memref<193xf32, #tpu.memory_space<smem>>
    %19 = vector.broadcast %18 : f32 to vector<8x128xf32>
    %20 = arith.mulf %19, %3 : vector<8x128xf32>
    %c65 = arith.constant 65 : index
    %21 = memref.load %arg1[%c65] : memref<193xf32, #tpu.memory_space<smem>>
    %22 = vector.broadcast %21 : f32 to vector<8x128xf32>
    %23 = arith.addf %20, %22 : vector<8x128xf32>
    %cst_1 = arith.constant 0.000000e+00 : f32
    %24 = vector.broadcast %cst_1 : f32 to vector<8x128xf32>
    %25 = arith.maximumf %23, %24 : vector<8x128xf32>
    %c129 = arith.constant 129 : index
    %26 = memref.load %arg1[%c129] : memref<193xf32, #tpu.memory_space<smem>>
    %27 = vector.broadcast %26 : f32 to vector<8x128xf32>
    %28 = arith.mulf %27, %25 : vector<8x128xf32>
    %29 = arith.addf %17, %28 : vector<8x128xf32>
    %c2 = arith.constant 2 : index
    %30 = memref.load %arg1[%c2] : memref<193xf32, #tpu.memory_space<smem>>
    %31 = vector.broadcast %30 : f32 to vector<8x128xf32>
    %32 = arith.mulf %31, %3 : vector<8x128xf32>
    %c66 = arith.constant 66 : index
    %33 = memref.load %arg1[%c66] : memref<193xf32, #tpu.memory_space<smem>>
    %34 = vector.broadcast %33 : f32 to vector<8x128xf32>
    %35 = arith.addf %32, %34 : vector<8x128xf32>
    %cst_2 = arith.constant 0.000000e+00 : f32
    %36 = vector.broadcast %cst_2 : f32 to vector<8x128xf32>
    %37 = arith.maximumf %35, %36 : vector<8x128xf32>
    %c130 = arith.constant 130 : index
    %38 = memref.load %arg1[%c130] : memref<193xf32, #tpu.memory_space<smem>>
    %39 = vector.broadcast %38 : f32 to vector<8x128xf32>
    %40 = arith.mulf %39, %37 : vector<8x128xf32>
    %41 = arith.addf %29, %40 : vector<8x128xf32>
    %c3 = arith.constant 3 : index
    %42 = memref.load %arg1[%c3] : memref<193xf32, #tpu.memory_space<smem>>
    %43 = vector.broadcast %42 : f32 to vector<8x128xf32>
    %44 = arith.mulf %43, %3 : vector<8x128xf32>
    %c67 = arith.constant 67 : index
    %45 = memref.load %arg1[%c67] : memref<193xf32, #tpu.memory_space<smem>>
    %46 = vector.broadcast %45 : f32 to vector<8x128xf32>
    %47 = arith.addf %44, %46 : vector<8x128xf32>
    %cst_3 = arith.constant 0.000000e+00 : f32
    %48 = vector.broadcast %cst_3 : f32 to vector<8x128xf32>
    %49 = arith.maximumf %47, %48 : vector<8x128xf32>
    %c131 = arith.constant 131 : index
    %50 = memref.load %arg1[%c131] : memref<193xf32, #tpu.memory_space<smem>>
    %51 = vector.broadcast %50 : f32 to vector<8x128xf32>
    %52 = arith.mulf %51, %49 : vector<8x128xf32>
    %53 = arith.addf %41, %52 : vector<8x128xf32>
    %c4 = arith.constant 4 : index
    %54 = memref.load %arg1[%c4] : memref<193xf32, #tpu.memory_space<smem>>
    %55 = vector.broadcast %54 : f32 to vector<8x128xf32>
    %56 = arith.mulf %55, %3 : vector<8x128xf32>
    %c68 = arith.constant 68 : index
    %57 = memref.load %arg1[%c68] : memref<193xf32, #tpu.memory_space<smem>>
    %58 = vector.broadcast %57 : f32 to vector<8x128xf32>
    %59 = arith.addf %56, %58 : vector<8x128xf32>
    %cst_4 = arith.constant 0.000000e+00 : f32
    %60 = vector.broadcast %cst_4 : f32 to vector<8x128xf32>
    %61 = arith.maximumf %59, %60 : vector<8x128xf32>
    %c132 = arith.constant 132 : index
    %62 = memref.load %arg1[%c132] : memref<193xf32, #tpu.memory_space<smem>>
    %63 = vector.broadcast %62 : f32 to vector<8x128xf32>
    %64 = arith.mulf %63, %61 : vector<8x128xf32>
    %65 = arith.addf %53, %64 : vector<8x128xf32>
    %c5 = arith.constant 5 : index
    %66 = memref.load %arg1[%c5] : memref<193xf32, #tpu.memory_space<smem>>
    %67 = vector.broadcast %66 : f32 to vector<8x128xf32>
    %68 = arith.mulf %67, %3 : vector<8x128xf32>
    %c69 = arith.constant 69 : index
    %69 = memref.load %arg1[%c69] : memref<193xf32, #tpu.memory_space<smem>>
    %70 = vector.broadcast %69 : f32 to vector<8x128xf32>
    %71 = arith.addf %68, %70 : vector<8x128xf32>
    %cst_5 = arith.constant 0.000000e+00 : f32
    %72 = vector.broadcast %cst_5 : f32 to vector<8x128xf32>
    %73 = arith.maximumf %71, %72 : vector<8x128xf32>
    %c133 = arith.constant 133 : index
    %74 = memref.load %arg1[%c133] : memref<193xf32, #tpu.memory_space<smem>>
    %75 = vector.broadcast %74 : f32 to vector<8x128xf32>
    %76 = arith.mulf %75, %73 : vector<8x128xf32>
    %77 = arith.addf %65, %76 : vector<8x128xf32>
    %c6 = arith.constant 6 : index
    %78 = memref.load %arg1[%c6] : memref<193xf32, #tpu.memory_space<smem>>
    %79 = vector.broadcast %78 : f32 to vector<8x128xf32>
    %80 = arith.mulf %79, %3 : vector<8x128xf32>
    %c70 = arith.constant 70 : index
    %81 = memref.load %arg1[%c70] : memref<193xf32, #tpu.memory_space<smem>>
    %82 = vector.broadcast %81 : f32 to vector<8x128xf32>
    %83 = arith.addf %80, %82 : vector<8x128xf32>
    %cst_6 = arith.constant 0.000000e+00 : f32
    %84 = vector.broadcast %cst_6 : f32 to vector<8x128xf32>
    %85 = arith.maximumf %83, %84 : vector<8x128xf32>
    %c134 = arith.constant 134 : index
    %86 = memref.load %arg1[%c134] : memref<193xf32, #tpu.memory_space<smem>>
    %87 = vector.broadcast %86 : f32 to vector<8x128xf32>
    %88 = arith.mulf %87, %85 : vector<8x128xf32>
    %89 = arith.addf %77, %88 : vector<8x128xf32>
    %c7 = arith.constant 7 : index
    %90 = memref.load %arg1[%c7] : memref<193xf32, #tpu.memory_space<smem>>
    %91 = vector.broadcast %90 : f32 to vector<8x128xf32>
    %92 = arith.mulf %91, %3 : vector<8x128xf32>
    %c71 = arith.constant 71 : index
    %93 = memref.load %arg1[%c71] : memref<193xf32, #tpu.memory_space<smem>>
    %94 = vector.broadcast %93 : f32 to vector<8x128xf32>
    %95 = arith.addf %92, %94 : vector<8x128xf32>
    %cst_7 = arith.constant 0.000000e+00 : f32
    %96 = vector.broadcast %cst_7 : f32 to vector<8x128xf32>
    %97 = arith.maximumf %95, %96 : vector<8x128xf32>
    %c135 = arith.constant 135 : index
    %98 = memref.load %arg1[%c135] : memref<193xf32, #tpu.memory_space<smem>>
    %99 = vector.broadcast %98 : f32 to vector<8x128xf32>
    %100 = arith.mulf %99, %97 : vector<8x128xf32>
    %101 = arith.addf %89, %100 : vector<8x128xf32>
    %c8 = arith.constant 8 : index
    %102 = memref.load %arg1[%c8] : memref<193xf32, #tpu.memory_space<smem>>
    %103 = vector.broadcast %102 : f32 to vector<8x128xf32>
    %104 = arith.mulf %103, %3 : vector<8x128xf32>
    %c72 = arith.constant 72 : index
    %105 = memref.load %arg1[%c72] : memref<193xf32, #tpu.memory_space<smem>>
    %106 = vector.broadcast %105 : f32 to vector<8x128xf32>
    %107 = arith.addf %104, %106 : vector<8x128xf32>
    %cst_8 = arith.constant 0.000000e+00 : f32
    %108 = vector.broadcast %cst_8 : f32 to vector<8x128xf32>
    %109 = arith.maximumf %107, %108 : vector<8x128xf32>
    %c136 = arith.constant 136 : index
    %110 = memref.load %arg1[%c136] : memref<193xf32, #tpu.memory_space<smem>>
    %111 = vector.broadcast %110 : f32 to vector<8x128xf32>
    %112 = arith.mulf %111, %109 : vector<8x128xf32>
    %113 = arith.addf %101, %112 : vector<8x128xf32>
    %c9 = arith.constant 9 : index
    %114 = memref.load %arg1[%c9] : memref<193xf32, #tpu.memory_space<smem>>
    %115 = vector.broadcast %114 : f32 to vector<8x128xf32>
    %116 = arith.mulf %115, %3 : vector<8x128xf32>
    %c73 = arith.constant 73 : index
    %117 = memref.load %arg1[%c73] : memref<193xf32, #tpu.memory_space<smem>>
    %118 = vector.broadcast %117 : f32 to vector<8x128xf32>
    %119 = arith.addf %116, %118 : vector<8x128xf32>
    %cst_9 = arith.constant 0.000000e+00 : f32
    %120 = vector.broadcast %cst_9 : f32 to vector<8x128xf32>
    %121 = arith.maximumf %119, %120 : vector<8x128xf32>
    %c137 = arith.constant 137 : index
    %122 = memref.load %arg1[%c137] : memref<193xf32, #tpu.memory_space<smem>>
    %123 = vector.broadcast %122 : f32 to vector<8x128xf32>
    %124 = arith.mulf %123, %121 : vector<8x128xf32>
    %125 = arith.addf %113, %124 : vector<8x128xf32>
    %c10 = arith.constant 10 : index
    %126 = memref.load %arg1[%c10] : memref<193xf32, #tpu.memory_space<smem>>
    %127 = vector.broadcast %126 : f32 to vector<8x128xf32>
    %128 = arith.mulf %127, %3 : vector<8x128xf32>
    %c74 = arith.constant 74 : index
    %129 = memref.load %arg1[%c74] : memref<193xf32, #tpu.memory_space<smem>>
    %130 = vector.broadcast %129 : f32 to vector<8x128xf32>
    %131 = arith.addf %128, %130 : vector<8x128xf32>
    %cst_10 = arith.constant 0.000000e+00 : f32
    %132 = vector.broadcast %cst_10 : f32 to vector<8x128xf32>
    %133 = arith.maximumf %131, %132 : vector<8x128xf32>
    %c138 = arith.constant 138 : index
    %134 = memref.load %arg1[%c138] : memref<193xf32, #tpu.memory_space<smem>>
    %135 = vector.broadcast %134 : f32 to vector<8x128xf32>
    %136 = arith.mulf %135, %133 : vector<8x128xf32>
    %137 = arith.addf %125, %136 : vector<8x128xf32>
    %c11 = arith.constant 11 : index
    %138 = memref.load %arg1[%c11] : memref<193xf32, #tpu.memory_space<smem>>
    %139 = vector.broadcast %138 : f32 to vector<8x128xf32>
    %140 = arith.mulf %139, %3 : vector<8x128xf32>
    %c75 = arith.constant 75 : index
    %141 = memref.load %arg1[%c75] : memref<193xf32, #tpu.memory_space<smem>>
    %142 = vector.broadcast %141 : f32 to vector<8x128xf32>
    %143 = arith.addf %140, %142 : vector<8x128xf32>
    %cst_11 = arith.constant 0.000000e+00 : f32
    %144 = vector.broadcast %cst_11 : f32 to vector<8x128xf32>
    %145 = arith.maximumf %143, %144 : vector<8x128xf32>
    %c139 = arith.constant 139 : index
    %146 = memref.load %arg1[%c139] : memref<193xf32, #tpu.memory_space<smem>>
    %147 = vector.broadcast %146 : f32 to vector<8x128xf32>
    %148 = arith.mulf %147, %145 : vector<8x128xf32>
    %149 = arith.addf %137, %148 : vector<8x128xf32>
    %c12 = arith.constant 12 : index
    %150 = memref.load %arg1[%c12] : memref<193xf32, #tpu.memory_space<smem>>
    %151 = vector.broadcast %150 : f32 to vector<8x128xf32>
    %152 = arith.mulf %151, %3 : vector<8x128xf32>
    %c76 = arith.constant 76 : index
    %153 = memref.load %arg1[%c76] : memref<193xf32, #tpu.memory_space<smem>>
    %154 = vector.broadcast %153 : f32 to vector<8x128xf32>
    %155 = arith.addf %152, %154 : vector<8x128xf32>
    %cst_12 = arith.constant 0.000000e+00 : f32
    %156 = vector.broadcast %cst_12 : f32 to vector<8x128xf32>
    %157 = arith.maximumf %155, %156 : vector<8x128xf32>
    %c140 = arith.constant 140 : index
    %158 = memref.load %arg1[%c140] : memref<193xf32, #tpu.memory_space<smem>>
    %159 = vector.broadcast %158 : f32 to vector<8x128xf32>
    %160 = arith.mulf %159, %157 : vector<8x128xf32>
    %161 = arith.addf %149, %160 : vector<8x128xf32>
    %c13 = arith.constant 13 : index
    %162 = memref.load %arg1[%c13] : memref<193xf32, #tpu.memory_space<smem>>
    %163 = vector.broadcast %162 : f32 to vector<8x128xf32>
    %164 = arith.mulf %163, %3 : vector<8x128xf32>
    %c77 = arith.constant 77 : index
    %165 = memref.load %arg1[%c77] : memref<193xf32, #tpu.memory_space<smem>>
    %166 = vector.broadcast %165 : f32 to vector<8x128xf32>
    %167 = arith.addf %164, %166 : vector<8x128xf32>
    %cst_13 = arith.constant 0.000000e+00 : f32
    %168 = vector.broadcast %cst_13 : f32 to vector<8x128xf32>
    %169 = arith.maximumf %167, %168 : vector<8x128xf32>
    %c141 = arith.constant 141 : index
    %170 = memref.load %arg1[%c141] : memref<193xf32, #tpu.memory_space<smem>>
    %171 = vector.broadcast %170 : f32 to vector<8x128xf32>
    %172 = arith.mulf %171, %169 : vector<8x128xf32>
    %173 = arith.addf %161, %172 : vector<8x128xf32>
    %c14 = arith.constant 14 : index
    %174 = memref.load %arg1[%c14] : memref<193xf32, #tpu.memory_space<smem>>
    %175 = vector.broadcast %174 : f32 to vector<8x128xf32>
    %176 = arith.mulf %175, %3 : vector<8x128xf32>
    %c78 = arith.constant 78 : index
    %177 = memref.load %arg1[%c78] : memref<193xf32, #tpu.memory_space<smem>>
    %178 = vector.broadcast %177 : f32 to vector<8x128xf32>
    %179 = arith.addf %176, %178 : vector<8x128xf32>
    %cst_14 = arith.constant 0.000000e+00 : f32
    %180 = vector.broadcast %cst_14 : f32 to vector<8x128xf32>
    %181 = arith.maximumf %179, %180 : vector<8x128xf32>
    %c142 = arith.constant 142 : index
    %182 = memref.load %arg1[%c142] : memref<193xf32, #tpu.memory_space<smem>>
    %183 = vector.broadcast %182 : f32 to vector<8x128xf32>
    %184 = arith.mulf %183, %181 : vector<8x128xf32>
    %185 = arith.addf %173, %184 : vector<8x128xf32>
    %c15 = arith.constant 15 : index
    %186 = memref.load %arg1[%c15] : memref<193xf32, #tpu.memory_space<smem>>
    %187 = vector.broadcast %186 : f32 to vector<8x128xf32>
    %188 = arith.mulf %187, %3 : vector<8x128xf32>
    %c79 = arith.constant 79 : index
    %189 = memref.load %arg1[%c79] : memref<193xf32, #tpu.memory_space<smem>>
    %190 = vector.broadcast %189 : f32 to vector<8x128xf32>
    %191 = arith.addf %188, %190 : vector<8x128xf32>
    %cst_15 = arith.constant 0.000000e+00 : f32
    %192 = vector.broadcast %cst_15 : f32 to vector<8x128xf32>
    %193 = arith.maximumf %191, %192 : vector<8x128xf32>
    %c143 = arith.constant 143 : index
    %194 = memref.load %arg1[%c143] : memref<193xf32, #tpu.memory_space<smem>>
    %195 = vector.broadcast %194 : f32 to vector<8x128xf32>
    %196 = arith.mulf %195, %193 : vector<8x128xf32>
    %197 = arith.addf %185, %196 : vector<8x128xf32>
    %c16 = arith.constant 16 : index
    %198 = memref.load %arg1[%c16] : memref<193xf32, #tpu.memory_space<smem>>
    %199 = vector.broadcast %198 : f32 to vector<8x128xf32>
    %200 = arith.mulf %199, %3 : vector<8x128xf32>
    %c80 = arith.constant 80 : index
    %201 = memref.load %arg1[%c80] : memref<193xf32, #tpu.memory_space<smem>>
    %202 = vector.broadcast %201 : f32 to vector<8x128xf32>
    %203 = arith.addf %200, %202 : vector<8x128xf32>
    %cst_16 = arith.constant 0.000000e+00 : f32
    %204 = vector.broadcast %cst_16 : f32 to vector<8x128xf32>
    %205 = arith.maximumf %203, %204 : vector<8x128xf32>
    %c144 = arith.constant 144 : index
    %206 = memref.load %arg1[%c144] : memref<193xf32, #tpu.memory_space<smem>>
    %207 = vector.broadcast %206 : f32 to vector<8x128xf32>
    %208 = arith.mulf %207, %205 : vector<8x128xf32>
    %209 = arith.addf %197, %208 : vector<8x128xf32>
    %c17 = arith.constant 17 : index
    %210 = memref.load %arg1[%c17] : memref<193xf32, #tpu.memory_space<smem>>
    %211 = vector.broadcast %210 : f32 to vector<8x128xf32>
    %212 = arith.mulf %211, %3 : vector<8x128xf32>
    %c81 = arith.constant 81 : index
    %213 = memref.load %arg1[%c81] : memref<193xf32, #tpu.memory_space<smem>>
    %214 = vector.broadcast %213 : f32 to vector<8x128xf32>
    %215 = arith.addf %212, %214 : vector<8x128xf32>
    %cst_17 = arith.constant 0.000000e+00 : f32
    %216 = vector.broadcast %cst_17 : f32 to vector<8x128xf32>
    %217 = arith.maximumf %215, %216 : vector<8x128xf32>
    %c145 = arith.constant 145 : index
    %218 = memref.load %arg1[%c145] : memref<193xf32, #tpu.memory_space<smem>>
    %219 = vector.broadcast %218 : f32 to vector<8x128xf32>
    %220 = arith.mulf %219, %217 : vector<8x128xf32>
    %221 = arith.addf %209, %220 : vector<8x128xf32>
    %c18 = arith.constant 18 : index
    %222 = memref.load %arg1[%c18] : memref<193xf32, #tpu.memory_space<smem>>
    %223 = vector.broadcast %222 : f32 to vector<8x128xf32>
    %224 = arith.mulf %223, %3 : vector<8x128xf32>
    %c82 = arith.constant 82 : index
    %225 = memref.load %arg1[%c82] : memref<193xf32, #tpu.memory_space<smem>>
    %226 = vector.broadcast %225 : f32 to vector<8x128xf32>
    %227 = arith.addf %224, %226 : vector<8x128xf32>
    %cst_18 = arith.constant 0.000000e+00 : f32
    %228 = vector.broadcast %cst_18 : f32 to vector<8x128xf32>
    %229 = arith.maximumf %227, %228 : vector<8x128xf32>
    %c146 = arith.constant 146 : index
    %230 = memref.load %arg1[%c146] : memref<193xf32, #tpu.memory_space<smem>>
    %231 = vector.broadcast %230 : f32 to vector<8x128xf32>
    %232 = arith.mulf %231, %229 : vector<8x128xf32>
    %233 = arith.addf %221, %232 : vector<8x128xf32>
    %c19 = arith.constant 19 : index
    %234 = memref.load %arg1[%c19] : memref<193xf32, #tpu.memory_space<smem>>
    %235 = vector.broadcast %234 : f32 to vector<8x128xf32>
    %236 = arith.mulf %235, %3 : vector<8x128xf32>
    %c83 = arith.constant 83 : index
    %237 = memref.load %arg1[%c83] : memref<193xf32, #tpu.memory_space<smem>>
    %238 = vector.broadcast %237 : f32 to vector<8x128xf32>
    %239 = arith.addf %236, %238 : vector<8x128xf32>
    %cst_19 = arith.constant 0.000000e+00 : f32
    %240 = vector.broadcast %cst_19 : f32 to vector<8x128xf32>
    %241 = arith.maximumf %239, %240 : vector<8x128xf32>
    %c147 = arith.constant 147 : index
    %242 = memref.load %arg1[%c147] : memref<193xf32, #tpu.memory_space<smem>>
    %243 = vector.broadcast %242 : f32 to vector<8x128xf32>
    %244 = arith.mulf %243, %241 : vector<8x128xf32>
    %245 = arith.addf %233, %244 : vector<8x128xf32>
    %c20 = arith.constant 20 : index
    %246 = memref.load %arg1[%c20] : memref<193xf32, #tpu.memory_space<smem>>
    %247 = vector.broadcast %246 : f32 to vector<8x128xf32>
    %248 = arith.mulf %247, %3 : vector<8x128xf32>
    %c84 = arith.constant 84 : index
    %249 = memref.load %arg1[%c84] : memref<193xf32, #tpu.memory_space<smem>>
    %250 = vector.broadcast %249 : f32 to vector<8x128xf32>
    %251 = arith.addf %248, %250 : vector<8x128xf32>
    %cst_20 = arith.constant 0.000000e+00 : f32
    %252 = vector.broadcast %cst_20 : f32 to vector<8x128xf32>
    %253 = arith.maximumf %251, %252 : vector<8x128xf32>
    %c148 = arith.constant 148 : index
    %254 = memref.load %arg1[%c148] : memref<193xf32, #tpu.memory_space<smem>>
    %255 = vector.broadcast %254 : f32 to vector<8x128xf32>
    %256 = arith.mulf %255, %253 : vector<8x128xf32>
    %257 = arith.addf %245, %256 : vector<8x128xf32>
    %c21 = arith.constant 21 : index
    %258 = memref.load %arg1[%c21] : memref<193xf32, #tpu.memory_space<smem>>
    %259 = vector.broadcast %258 : f32 to vector<8x128xf32>
    %260 = arith.mulf %259, %3 : vector<8x128xf32>
    %c85 = arith.constant 85 : index
    %261 = memref.load %arg1[%c85] : memref<193xf32, #tpu.memory_space<smem>>
    %262 = vector.broadcast %261 : f32 to vector<8x128xf32>
    %263 = arith.addf %260, %262 : vector<8x128xf32>
    %cst_21 = arith.constant 0.000000e+00 : f32
    %264 = vector.broadcast %cst_21 : f32 to vector<8x128xf32>
    %265 = arith.maximumf %263, %264 : vector<8x128xf32>
    %c149 = arith.constant 149 : index
    %266 = memref.load %arg1[%c149] : memref<193xf32, #tpu.memory_space<smem>>
    %267 = vector.broadcast %266 : f32 to vector<8x128xf32>
    %268 = arith.mulf %267, %265 : vector<8x128xf32>
    %269 = arith.addf %257, %268 : vector<8x128xf32>
    %c22 = arith.constant 22 : index
    %270 = memref.load %arg1[%c22] : memref<193xf32, #tpu.memory_space<smem>>
    %271 = vector.broadcast %270 : f32 to vector<8x128xf32>
    %272 = arith.mulf %271, %3 : vector<8x128xf32>
    %c86 = arith.constant 86 : index
    %273 = memref.load %arg1[%c86] : memref<193xf32, #tpu.memory_space<smem>>
    %274 = vector.broadcast %273 : f32 to vector<8x128xf32>
    %275 = arith.addf %272, %274 : vector<8x128xf32>
    %cst_22 = arith.constant 0.000000e+00 : f32
    %276 = vector.broadcast %cst_22 : f32 to vector<8x128xf32>
    %277 = arith.maximumf %275, %276 : vector<8x128xf32>
    %c150 = arith.constant 150 : index
    %278 = memref.load %arg1[%c150] : memref<193xf32, #tpu.memory_space<smem>>
    %279 = vector.broadcast %278 : f32 to vector<8x128xf32>
    %280 = arith.mulf %279, %277 : vector<8x128xf32>
    %281 = arith.addf %269, %280 : vector<8x128xf32>
    %c23 = arith.constant 23 : index
    %282 = memref.load %arg1[%c23] : memref<193xf32, #tpu.memory_space<smem>>
    %283 = vector.broadcast %282 : f32 to vector<8x128xf32>
    %284 = arith.mulf %283, %3 : vector<8x128xf32>
    %c87 = arith.constant 87 : index
    %285 = memref.load %arg1[%c87] : memref<193xf32, #tpu.memory_space<smem>>
    %286 = vector.broadcast %285 : f32 to vector<8x128xf32>
    %287 = arith.addf %284, %286 : vector<8x128xf32>
    %cst_23 = arith.constant 0.000000e+00 : f32
    %288 = vector.broadcast %cst_23 : f32 to vector<8x128xf32>
    %289 = arith.maximumf %287, %288 : vector<8x128xf32>
    %c151 = arith.constant 151 : index
    %290 = memref.load %arg1[%c151] : memref<193xf32, #tpu.memory_space<smem>>
    %291 = vector.broadcast %290 : f32 to vector<8x128xf32>
    %292 = arith.mulf %291, %289 : vector<8x128xf32>
    %293 = arith.addf %281, %292 : vector<8x128xf32>
    %c24 = arith.constant 24 : index
    %294 = memref.load %arg1[%c24] : memref<193xf32, #tpu.memory_space<smem>>
    %295 = vector.broadcast %294 : f32 to vector<8x128xf32>
    %296 = arith.mulf %295, %3 : vector<8x128xf32>
    %c88 = arith.constant 88 : index
    %297 = memref.load %arg1[%c88] : memref<193xf32, #tpu.memory_space<smem>>
    %298 = vector.broadcast %297 : f32 to vector<8x128xf32>
    %299 = arith.addf %296, %298 : vector<8x128xf32>
    %cst_24 = arith.constant 0.000000e+00 : f32
    %300 = vector.broadcast %cst_24 : f32 to vector<8x128xf32>
    %301 = arith.maximumf %299, %300 : vector<8x128xf32>
    %c152 = arith.constant 152 : index
    %302 = memref.load %arg1[%c152] : memref<193xf32, #tpu.memory_space<smem>>
    %303 = vector.broadcast %302 : f32 to vector<8x128xf32>
    %304 = arith.mulf %303, %301 : vector<8x128xf32>
    %305 = arith.addf %293, %304 : vector<8x128xf32>
    %c25 = arith.constant 25 : index
    %306 = memref.load %arg1[%c25] : memref<193xf32, #tpu.memory_space<smem>>
    %307 = vector.broadcast %306 : f32 to vector<8x128xf32>
    %308 = arith.mulf %307, %3 : vector<8x128xf32>
    %c89 = arith.constant 89 : index
    %309 = memref.load %arg1[%c89] : memref<193xf32, #tpu.memory_space<smem>>
    %310 = vector.broadcast %309 : f32 to vector<8x128xf32>
    %311 = arith.addf %308, %310 : vector<8x128xf32>
    %cst_25 = arith.constant 0.000000e+00 : f32
    %312 = vector.broadcast %cst_25 : f32 to vector<8x128xf32>
    %313 = arith.maximumf %311, %312 : vector<8x128xf32>
    %c153 = arith.constant 153 : index
    %314 = memref.load %arg1[%c153] : memref<193xf32, #tpu.memory_space<smem>>
    %315 = vector.broadcast %314 : f32 to vector<8x128xf32>
    %316 = arith.mulf %315, %313 : vector<8x128xf32>
    %317 = arith.addf %305, %316 : vector<8x128xf32>
    %c26 = arith.constant 26 : index
    %318 = memref.load %arg1[%c26] : memref<193xf32, #tpu.memory_space<smem>>
    %319 = vector.broadcast %318 : f32 to vector<8x128xf32>
    %320 = arith.mulf %319, %3 : vector<8x128xf32>
    %c90 = arith.constant 90 : index
    %321 = memref.load %arg1[%c90] : memref<193xf32, #tpu.memory_space<smem>>
    %322 = vector.broadcast %321 : f32 to vector<8x128xf32>
    %323 = arith.addf %320, %322 : vector<8x128xf32>
    %cst_26 = arith.constant 0.000000e+00 : f32
    %324 = vector.broadcast %cst_26 : f32 to vector<8x128xf32>
    %325 = arith.maximumf %323, %324 : vector<8x128xf32>
    %c154 = arith.constant 154 : index
    %326 = memref.load %arg1[%c154] : memref<193xf32, #tpu.memory_space<smem>>
    %327 = vector.broadcast %326 : f32 to vector<8x128xf32>
    %328 = arith.mulf %327, %325 : vector<8x128xf32>
    %329 = arith.addf %317, %328 : vector<8x128xf32>
    %c27 = arith.constant 27 : index
    %330 = memref.load %arg1[%c27] : memref<193xf32, #tpu.memory_space<smem>>
    %331 = vector.broadcast %330 : f32 to vector<8x128xf32>
    %332 = arith.mulf %331, %3 : vector<8x128xf32>
    %c91 = arith.constant 91 : index
    %333 = memref.load %arg1[%c91] : memref<193xf32, #tpu.memory_space<smem>>
    %334 = vector.broadcast %333 : f32 to vector<8x128xf32>
    %335 = arith.addf %332, %334 : vector<8x128xf32>
    %cst_27 = arith.constant 0.000000e+00 : f32
    %336 = vector.broadcast %cst_27 : f32 to vector<8x128xf32>
    %337 = arith.maximumf %335, %336 : vector<8x128xf32>
    %c155 = arith.constant 155 : index
    %338 = memref.load %arg1[%c155] : memref<193xf32, #tpu.memory_space<smem>>
    %339 = vector.broadcast %338 : f32 to vector<8x128xf32>
    %340 = arith.mulf %339, %337 : vector<8x128xf32>
    %341 = arith.addf %329, %340 : vector<8x128xf32>
    %c28 = arith.constant 28 : index
    %342 = memref.load %arg1[%c28] : memref<193xf32, #tpu.memory_space<smem>>
    %343 = vector.broadcast %342 : f32 to vector<8x128xf32>
    %344 = arith.mulf %343, %3 : vector<8x128xf32>
    %c92 = arith.constant 92 : index
    %345 = memref.load %arg1[%c92] : memref<193xf32, #tpu.memory_space<smem>>
    %346 = vector.broadcast %345 : f32 to vector<8x128xf32>
    %347 = arith.addf %344, %346 : vector<8x128xf32>
    %cst_28 = arith.constant 0.000000e+00 : f32
    %348 = vector.broadcast %cst_28 : f32 to vector<8x128xf32>
    %349 = arith.maximumf %347, %348 : vector<8x128xf32>
    %c156 = arith.constant 156 : index
    %350 = memref.load %arg1[%c156] : memref<193xf32, #tpu.memory_space<smem>>
    %351 = vector.broadcast %350 : f32 to vector<8x128xf32>
    %352 = arith.mulf %351, %349 : vector<8x128xf32>
    %353 = arith.addf %341, %352 : vector<8x128xf32>
    %c29 = arith.constant 29 : index
    %354 = memref.load %arg1[%c29] : memref<193xf32, #tpu.memory_space<smem>>
    %355 = vector.broadcast %354 : f32 to vector<8x128xf32>
    %356 = arith.mulf %355, %3 : vector<8x128xf32>
    %c93 = arith.constant 93 : index
    %357 = memref.load %arg1[%c93] : memref<193xf32, #tpu.memory_space<smem>>
    %358 = vector.broadcast %357 : f32 to vector<8x128xf32>
    %359 = arith.addf %356, %358 : vector<8x128xf32>
    %cst_29 = arith.constant 0.000000e+00 : f32
    %360 = vector.broadcast %cst_29 : f32 to vector<8x128xf32>
    %361 = arith.maximumf %359, %360 : vector<8x128xf32>
    %c157 = arith.constant 157 : index
    %362 = memref.load %arg1[%c157] : memref<193xf32, #tpu.memory_space<smem>>
    %363 = vector.broadcast %362 : f32 to vector<8x128xf32>
    %364 = arith.mulf %363, %361 : vector<8x128xf32>
    %365 = arith.addf %353, %364 : vector<8x128xf32>
    %c30 = arith.constant 30 : index
    %366 = memref.load %arg1[%c30] : memref<193xf32, #tpu.memory_space<smem>>
    %367 = vector.broadcast %366 : f32 to vector<8x128xf32>
    %368 = arith.mulf %367, %3 : vector<8x128xf32>
    %c94 = arith.constant 94 : index
    %369 = memref.load %arg1[%c94] : memref<193xf32, #tpu.memory_space<smem>>
    %370 = vector.broadcast %369 : f32 to vector<8x128xf32>
    %371 = arith.addf %368, %370 : vector<8x128xf32>
    %cst_30 = arith.constant 0.000000e+00 : f32
    %372 = vector.broadcast %cst_30 : f32 to vector<8x128xf32>
    %373 = arith.maximumf %371, %372 : vector<8x128xf32>
    %c158 = arith.constant 158 : index
    %374 = memref.load %arg1[%c158] : memref<193xf32, #tpu.memory_space<smem>>
    %375 = vector.broadcast %374 : f32 to vector<8x128xf32>
    %376 = arith.mulf %375, %373 : vector<8x128xf32>
    %377 = arith.addf %365, %376 : vector<8x128xf32>
    %c31 = arith.constant 31 : index
    %378 = memref.load %arg1[%c31] : memref<193xf32, #tpu.memory_space<smem>>
    %379 = vector.broadcast %378 : f32 to vector<8x128xf32>
    %380 = arith.mulf %379, %3 : vector<8x128xf32>
    %c95 = arith.constant 95 : index
    %381 = memref.load %arg1[%c95] : memref<193xf32, #tpu.memory_space<smem>>
    %382 = vector.broadcast %381 : f32 to vector<8x128xf32>
    %383 = arith.addf %380, %382 : vector<8x128xf32>
    %cst_31 = arith.constant 0.000000e+00 : f32
    %384 = vector.broadcast %cst_31 : f32 to vector<8x128xf32>
    %385 = arith.maximumf %383, %384 : vector<8x128xf32>
    %c159 = arith.constant 159 : index
    %386 = memref.load %arg1[%c159] : memref<193xf32, #tpu.memory_space<smem>>
    %387 = vector.broadcast %386 : f32 to vector<8x128xf32>
    %388 = arith.mulf %387, %385 : vector<8x128xf32>
    %389 = arith.addf %377, %388 : vector<8x128xf32>
    %c32 = arith.constant 32 : index
    %390 = memref.load %arg1[%c32] : memref<193xf32, #tpu.memory_space<smem>>
    %391 = vector.broadcast %390 : f32 to vector<8x128xf32>
    %392 = arith.mulf %391, %3 : vector<8x128xf32>
    %c96 = arith.constant 96 : index
    %393 = memref.load %arg1[%c96] : memref<193xf32, #tpu.memory_space<smem>>
    %394 = vector.broadcast %393 : f32 to vector<8x128xf32>
    %395 = arith.addf %392, %394 : vector<8x128xf32>
    %cst_32 = arith.constant 0.000000e+00 : f32
    %396 = vector.broadcast %cst_32 : f32 to vector<8x128xf32>
    %397 = arith.maximumf %395, %396 : vector<8x128xf32>
    %c160 = arith.constant 160 : index
    %398 = memref.load %arg1[%c160] : memref<193xf32, #tpu.memory_space<smem>>
    %399 = vector.broadcast %398 : f32 to vector<8x128xf32>
    %400 = arith.mulf %399, %397 : vector<8x128xf32>
    %401 = arith.addf %389, %400 : vector<8x128xf32>
    %c33 = arith.constant 33 : index
    %402 = memref.load %arg1[%c33] : memref<193xf32, #tpu.memory_space<smem>>
    %403 = vector.broadcast %402 : f32 to vector<8x128xf32>
    %404 = arith.mulf %403, %3 : vector<8x128xf32>
    %c97 = arith.constant 97 : index
    %405 = memref.load %arg1[%c97] : memref<193xf32, #tpu.memory_space<smem>>
    %406 = vector.broadcast %405 : f32 to vector<8x128xf32>
    %407 = arith.addf %404, %406 : vector<8x128xf32>
    %cst_33 = arith.constant 0.000000e+00 : f32
    %408 = vector.broadcast %cst_33 : f32 to vector<8x128xf32>
    %409 = arith.maximumf %407, %408 : vector<8x128xf32>
    %c161 = arith.constant 161 : index
    %410 = memref.load %arg1[%c161] : memref<193xf32, #tpu.memory_space<smem>>
    %411 = vector.broadcast %410 : f32 to vector<8x128xf32>
    %412 = arith.mulf %411, %409 : vector<8x128xf32>
    %413 = arith.addf %401, %412 : vector<8x128xf32>
    %c34 = arith.constant 34 : index
    %414 = memref.load %arg1[%c34] : memref<193xf32, #tpu.memory_space<smem>>
    %415 = vector.broadcast %414 : f32 to vector<8x128xf32>
    %416 = arith.mulf %415, %3 : vector<8x128xf32>
    %c98 = arith.constant 98 : index
    %417 = memref.load %arg1[%c98] : memref<193xf32, #tpu.memory_space<smem>>
    %418 = vector.broadcast %417 : f32 to vector<8x128xf32>
    %419 = arith.addf %416, %418 : vector<8x128xf32>
    %cst_34 = arith.constant 0.000000e+00 : f32
    %420 = vector.broadcast %cst_34 : f32 to vector<8x128xf32>
    %421 = arith.maximumf %419, %420 : vector<8x128xf32>
    %c162 = arith.constant 162 : index
    %422 = memref.load %arg1[%c162] : memref<193xf32, #tpu.memory_space<smem>>
    %423 = vector.broadcast %422 : f32 to vector<8x128xf32>
    %424 = arith.mulf %423, %421 : vector<8x128xf32>
    %425 = arith.addf %413, %424 : vector<8x128xf32>
    %c35 = arith.constant 35 : index
    %426 = memref.load %arg1[%c35] : memref<193xf32, #tpu.memory_space<smem>>
    %427 = vector.broadcast %426 : f32 to vector<8x128xf32>
    %428 = arith.mulf %427, %3 : vector<8x128xf32>
    %c99 = arith.constant 99 : index
    %429 = memref.load %arg1[%c99] : memref<193xf32, #tpu.memory_space<smem>>
    %430 = vector.broadcast %429 : f32 to vector<8x128xf32>
    %431 = arith.addf %428, %430 : vector<8x128xf32>
    %cst_35 = arith.constant 0.000000e+00 : f32
    %432 = vector.broadcast %cst_35 : f32 to vector<8x128xf32>
    %433 = arith.maximumf %431, %432 : vector<8x128xf32>
    %c163 = arith.constant 163 : index
    %434 = memref.load %arg1[%c163] : memref<193xf32, #tpu.memory_space<smem>>
    %435 = vector.broadcast %434 : f32 to vector<8x128xf32>
    %436 = arith.mulf %435, %433 : vector<8x128xf32>
    %437 = arith.addf %425, %436 : vector<8x128xf32>
    %c36 = arith.constant 36 : index
    %438 = memref.load %arg1[%c36] : memref<193xf32, #tpu.memory_space<smem>>
    %439 = vector.broadcast %438 : f32 to vector<8x128xf32>
    %440 = arith.mulf %439, %3 : vector<8x128xf32>
    %c100 = arith.constant 100 : index
    %441 = memref.load %arg1[%c100] : memref<193xf32, #tpu.memory_space<smem>>
    %442 = vector.broadcast %441 : f32 to vector<8x128xf32>
    %443 = arith.addf %440, %442 : vector<8x128xf32>
    %cst_36 = arith.constant 0.000000e+00 : f32
    %444 = vector.broadcast %cst_36 : f32 to vector<8x128xf32>
    %445 = arith.maximumf %443, %444 : vector<8x128xf32>
    %c164 = arith.constant 164 : index
    %446 = memref.load %arg1[%c164] : memref<193xf32, #tpu.memory_space<smem>>
    %447 = vector.broadcast %446 : f32 to vector<8x128xf32>
    %448 = arith.mulf %447, %445 : vector<8x128xf32>
    %449 = arith.addf %437, %448 : vector<8x128xf32>
    %c37 = arith.constant 37 : index
    %450 = memref.load %arg1[%c37] : memref<193xf32, #tpu.memory_space<smem>>
    %451 = vector.broadcast %450 : f32 to vector<8x128xf32>
    %452 = arith.mulf %451, %3 : vector<8x128xf32>
    %c101 = arith.constant 101 : index
    %453 = memref.load %arg1[%c101] : memref<193xf32, #tpu.memory_space<smem>>
    %454 = vector.broadcast %453 : f32 to vector<8x128xf32>
    %455 = arith.addf %452, %454 : vector<8x128xf32>
    %cst_37 = arith.constant 0.000000e+00 : f32
    %456 = vector.broadcast %cst_37 : f32 to vector<8x128xf32>
    %457 = arith.maximumf %455, %456 : vector<8x128xf32>
    %c165 = arith.constant 165 : index
    %458 = memref.load %arg1[%c165] : memref<193xf32, #tpu.memory_space<smem>>
    %459 = vector.broadcast %458 : f32 to vector<8x128xf32>
    %460 = arith.mulf %459, %457 : vector<8x128xf32>
    %461 = arith.addf %449, %460 : vector<8x128xf32>
    %c38 = arith.constant 38 : index
    %462 = memref.load %arg1[%c38] : memref<193xf32, #tpu.memory_space<smem>>
    %463 = vector.broadcast %462 : f32 to vector<8x128xf32>
    %464 = arith.mulf %463, %3 : vector<8x128xf32>
    %c102 = arith.constant 102 : index
    %465 = memref.load %arg1[%c102] : memref<193xf32, #tpu.memory_space<smem>>
    %466 = vector.broadcast %465 : f32 to vector<8x128xf32>
    %467 = arith.addf %464, %466 : vector<8x128xf32>
    %cst_38 = arith.constant 0.000000e+00 : f32
    %468 = vector.broadcast %cst_38 : f32 to vector<8x128xf32>
    %469 = arith.maximumf %467, %468 : vector<8x128xf32>
    %c166 = arith.constant 166 : index
    %470 = memref.load %arg1[%c166] : memref<193xf32, #tpu.memory_space<smem>>
    %471 = vector.broadcast %470 : f32 to vector<8x128xf32>
    %472 = arith.mulf %471, %469 : vector<8x128xf32>
    %473 = arith.addf %461, %472 : vector<8x128xf32>
    %c39 = arith.constant 39 : index
    %474 = memref.load %arg1[%c39] : memref<193xf32, #tpu.memory_space<smem>>
    %475 = vector.broadcast %474 : f32 to vector<8x128xf32>
    %476 = arith.mulf %475, %3 : vector<8x128xf32>
    %c103 = arith.constant 103 : index
    %477 = memref.load %arg1[%c103] : memref<193xf32, #tpu.memory_space<smem>>
    %478 = vector.broadcast %477 : f32 to vector<8x128xf32>
    %479 = arith.addf %476, %478 : vector<8x128xf32>
    %cst_39 = arith.constant 0.000000e+00 : f32
    %480 = vector.broadcast %cst_39 : f32 to vector<8x128xf32>
    %481 = arith.maximumf %479, %480 : vector<8x128xf32>
    %c167 = arith.constant 167 : index
    %482 = memref.load %arg1[%c167] : memref<193xf32, #tpu.memory_space<smem>>
    %483 = vector.broadcast %482 : f32 to vector<8x128xf32>
    %484 = arith.mulf %483, %481 : vector<8x128xf32>
    %485 = arith.addf %473, %484 : vector<8x128xf32>
    %c40 = arith.constant 40 : index
    %486 = memref.load %arg1[%c40] : memref<193xf32, #tpu.memory_space<smem>>
    %487 = vector.broadcast %486 : f32 to vector<8x128xf32>
    %488 = arith.mulf %487, %3 : vector<8x128xf32>
    %c104 = arith.constant 104 : index
    %489 = memref.load %arg1[%c104] : memref<193xf32, #tpu.memory_space<smem>>
    %490 = vector.broadcast %489 : f32 to vector<8x128xf32>
    %491 = arith.addf %488, %490 : vector<8x128xf32>
    %cst_40 = arith.constant 0.000000e+00 : f32
    %492 = vector.broadcast %cst_40 : f32 to vector<8x128xf32>
    %493 = arith.maximumf %491, %492 : vector<8x128xf32>
    %c168 = arith.constant 168 : index
    %494 = memref.load %arg1[%c168] : memref<193xf32, #tpu.memory_space<smem>>
    %495 = vector.broadcast %494 : f32 to vector<8x128xf32>
    %496 = arith.mulf %495, %493 : vector<8x128xf32>
    %497 = arith.addf %485, %496 : vector<8x128xf32>
    %c41 = arith.constant 41 : index
    %498 = memref.load %arg1[%c41] : memref<193xf32, #tpu.memory_space<smem>>
    %499 = vector.broadcast %498 : f32 to vector<8x128xf32>
    %500 = arith.mulf %499, %3 : vector<8x128xf32>
    %c105 = arith.constant 105 : index
    %501 = memref.load %arg1[%c105] : memref<193xf32, #tpu.memory_space<smem>>
    %502 = vector.broadcast %501 : f32 to vector<8x128xf32>
    %503 = arith.addf %500, %502 : vector<8x128xf32>
    %cst_41 = arith.constant 0.000000e+00 : f32
    %504 = vector.broadcast %cst_41 : f32 to vector<8x128xf32>
    %505 = arith.maximumf %503, %504 : vector<8x128xf32>
    %c169 = arith.constant 169 : index
    %506 = memref.load %arg1[%c169] : memref<193xf32, #tpu.memory_space<smem>>
    %507 = vector.broadcast %506 : f32 to vector<8x128xf32>
    %508 = arith.mulf %507, %505 : vector<8x128xf32>
    %509 = arith.addf %497, %508 : vector<8x128xf32>
    %c42 = arith.constant 42 : index
    %510 = memref.load %arg1[%c42] : memref<193xf32, #tpu.memory_space<smem>>
    %511 = vector.broadcast %510 : f32 to vector<8x128xf32>
    %512 = arith.mulf %511, %3 : vector<8x128xf32>
    %c106 = arith.constant 106 : index
    %513 = memref.load %arg1[%c106] : memref<193xf32, #tpu.memory_space<smem>>
    %514 = vector.broadcast %513 : f32 to vector<8x128xf32>
    %515 = arith.addf %512, %514 : vector<8x128xf32>
    %cst_42 = arith.constant 0.000000e+00 : f32
    %516 = vector.broadcast %cst_42 : f32 to vector<8x128xf32>
    %517 = arith.maximumf %515, %516 : vector<8x128xf32>
    %c170 = arith.constant 170 : index
    %518 = memref.load %arg1[%c170] : memref<193xf32, #tpu.memory_space<smem>>
    %519 = vector.broadcast %518 : f32 to vector<8x128xf32>
    %520 = arith.mulf %519, %517 : vector<8x128xf32>
    %521 = arith.addf %509, %520 : vector<8x128xf32>
    %c43 = arith.constant 43 : index
    %522 = memref.load %arg1[%c43] : memref<193xf32, #tpu.memory_space<smem>>
    %523 = vector.broadcast %522 : f32 to vector<8x128xf32>
    %524 = arith.mulf %523, %3 : vector<8x128xf32>
    %c107 = arith.constant 107 : index
    %525 = memref.load %arg1[%c107] : memref<193xf32, #tpu.memory_space<smem>>
    %526 = vector.broadcast %525 : f32 to vector<8x128xf32>
    %527 = arith.addf %524, %526 : vector<8x128xf32>
    %cst_43 = arith.constant 0.000000e+00 : f32
    %528 = vector.broadcast %cst_43 : f32 to vector<8x128xf32>
    %529 = arith.maximumf %527, %528 : vector<8x128xf32>
    %c171 = arith.constant 171 : index
    %530 = memref.load %arg1[%c171] : memref<193xf32, #tpu.memory_space<smem>>
    %531 = vector.broadcast %530 : f32 to vector<8x128xf32>
    %532 = arith.mulf %531, %529 : vector<8x128xf32>
    %533 = arith.addf %521, %532 : vector<8x128xf32>
    %c44 = arith.constant 44 : index
    %534 = memref.load %arg1[%c44] : memref<193xf32, #tpu.memory_space<smem>>
    %535 = vector.broadcast %534 : f32 to vector<8x128xf32>
    %536 = arith.mulf %535, %3 : vector<8x128xf32>
    %c108 = arith.constant 108 : index
    %537 = memref.load %arg1[%c108] : memref<193xf32, #tpu.memory_space<smem>>
    %538 = vector.broadcast %537 : f32 to vector<8x128xf32>
    %539 = arith.addf %536, %538 : vector<8x128xf32>
    %cst_44 = arith.constant 0.000000e+00 : f32
    %540 = vector.broadcast %cst_44 : f32 to vector<8x128xf32>
    %541 = arith.maximumf %539, %540 : vector<8x128xf32>
    %c172 = arith.constant 172 : index
    %542 = memref.load %arg1[%c172] : memref<193xf32, #tpu.memory_space<smem>>
    %543 = vector.broadcast %542 : f32 to vector<8x128xf32>
    %544 = arith.mulf %543, %541 : vector<8x128xf32>
    %545 = arith.addf %533, %544 : vector<8x128xf32>
    %c45 = arith.constant 45 : index
    %546 = memref.load %arg1[%c45] : memref<193xf32, #tpu.memory_space<smem>>
    %547 = vector.broadcast %546 : f32 to vector<8x128xf32>
    %548 = arith.mulf %547, %3 : vector<8x128xf32>
    %c109 = arith.constant 109 : index
    %549 = memref.load %arg1[%c109] : memref<193xf32, #tpu.memory_space<smem>>
    %550 = vector.broadcast %549 : f32 to vector<8x128xf32>
    %551 = arith.addf %548, %550 : vector<8x128xf32>
    %cst_45 = arith.constant 0.000000e+00 : f32
    %552 = vector.broadcast %cst_45 : f32 to vector<8x128xf32>
    %553 = arith.maximumf %551, %552 : vector<8x128xf32>
    %c173 = arith.constant 173 : index
    %554 = memref.load %arg1[%c173] : memref<193xf32, #tpu.memory_space<smem>>
    %555 = vector.broadcast %554 : f32 to vector<8x128xf32>
    %556 = arith.mulf %555, %553 : vector<8x128xf32>
    %557 = arith.addf %545, %556 : vector<8x128xf32>
    %c46 = arith.constant 46 : index
    %558 = memref.load %arg1[%c46] : memref<193xf32, #tpu.memory_space<smem>>
    %559 = vector.broadcast %558 : f32 to vector<8x128xf32>
    %560 = arith.mulf %559, %3 : vector<8x128xf32>
    %c110 = arith.constant 110 : index
    %561 = memref.load %arg1[%c110] : memref<193xf32, #tpu.memory_space<smem>>
    %562 = vector.broadcast %561 : f32 to vector<8x128xf32>
    %563 = arith.addf %560, %562 : vector<8x128xf32>
    %cst_46 = arith.constant 0.000000e+00 : f32
    %564 = vector.broadcast %cst_46 : f32 to vector<8x128xf32>
    %565 = arith.maximumf %563, %564 : vector<8x128xf32>
    %c174 = arith.constant 174 : index
    %566 = memref.load %arg1[%c174] : memref<193xf32, #tpu.memory_space<smem>>
    %567 = vector.broadcast %566 : f32 to vector<8x128xf32>
    %568 = arith.mulf %567, %565 : vector<8x128xf32>
    %569 = arith.addf %557, %568 : vector<8x128xf32>
    %c47 = arith.constant 47 : index
    %570 = memref.load %arg1[%c47] : memref<193xf32, #tpu.memory_space<smem>>
    %571 = vector.broadcast %570 : f32 to vector<8x128xf32>
    %572 = arith.mulf %571, %3 : vector<8x128xf32>
    %c111 = arith.constant 111 : index
    %573 = memref.load %arg1[%c111] : memref<193xf32, #tpu.memory_space<smem>>
    %574 = vector.broadcast %573 : f32 to vector<8x128xf32>
    %575 = arith.addf %572, %574 : vector<8x128xf32>
    %cst_47 = arith.constant 0.000000e+00 : f32
    %576 = vector.broadcast %cst_47 : f32 to vector<8x128xf32>
    %577 = arith.maximumf %575, %576 : vector<8x128xf32>
    %c175 = arith.constant 175 : index
    %578 = memref.load %arg1[%c175] : memref<193xf32, #tpu.memory_space<smem>>
    %579 = vector.broadcast %578 : f32 to vector<8x128xf32>
    %580 = arith.mulf %579, %577 : vector<8x128xf32>
    %581 = arith.addf %569, %580 : vector<8x128xf32>
    %c48 = arith.constant 48 : index
    %582 = memref.load %arg1[%c48] : memref<193xf32, #tpu.memory_space<smem>>
    %583 = vector.broadcast %582 : f32 to vector<8x128xf32>
    %584 = arith.mulf %583, %3 : vector<8x128xf32>
    %c112 = arith.constant 112 : index
    %585 = memref.load %arg1[%c112] : memref<193xf32, #tpu.memory_space<smem>>
    %586 = vector.broadcast %585 : f32 to vector<8x128xf32>
    %587 = arith.addf %584, %586 : vector<8x128xf32>
    %cst_48 = arith.constant 0.000000e+00 : f32
    %588 = vector.broadcast %cst_48 : f32 to vector<8x128xf32>
    %589 = arith.maximumf %587, %588 : vector<8x128xf32>
    %c176 = arith.constant 176 : index
    %590 = memref.load %arg1[%c176] : memref<193xf32, #tpu.memory_space<smem>>
    %591 = vector.broadcast %590 : f32 to vector<8x128xf32>
    %592 = arith.mulf %591, %589 : vector<8x128xf32>
    %593 = arith.addf %581, %592 : vector<8x128xf32>
    %c49 = arith.constant 49 : index
    %594 = memref.load %arg1[%c49] : memref<193xf32, #tpu.memory_space<smem>>
    %595 = vector.broadcast %594 : f32 to vector<8x128xf32>
    %596 = arith.mulf %595, %3 : vector<8x128xf32>
    %c113 = arith.constant 113 : index
    %597 = memref.load %arg1[%c113] : memref<193xf32, #tpu.memory_space<smem>>
    %598 = vector.broadcast %597 : f32 to vector<8x128xf32>
    %599 = arith.addf %596, %598 : vector<8x128xf32>
    %cst_49 = arith.constant 0.000000e+00 : f32
    %600 = vector.broadcast %cst_49 : f32 to vector<8x128xf32>
    %601 = arith.maximumf %599, %600 : vector<8x128xf32>
    %c177 = arith.constant 177 : index
    %602 = memref.load %arg1[%c177] : memref<193xf32, #tpu.memory_space<smem>>
    %603 = vector.broadcast %602 : f32 to vector<8x128xf32>
    %604 = arith.mulf %603, %601 : vector<8x128xf32>
    %605 = arith.addf %593, %604 : vector<8x128xf32>
    %c50 = arith.constant 50 : index
    %606 = memref.load %arg1[%c50] : memref<193xf32, #tpu.memory_space<smem>>
    %607 = vector.broadcast %606 : f32 to vector<8x128xf32>
    %608 = arith.mulf %607, %3 : vector<8x128xf32>
    %c114 = arith.constant 114 : index
    %609 = memref.load %arg1[%c114] : memref<193xf32, #tpu.memory_space<smem>>
    %610 = vector.broadcast %609 : f32 to vector<8x128xf32>
    %611 = arith.addf %608, %610 : vector<8x128xf32>
    %cst_50 = arith.constant 0.000000e+00 : f32
    %612 = vector.broadcast %cst_50 : f32 to vector<8x128xf32>
    %613 = arith.maximumf %611, %612 : vector<8x128xf32>
    %c178 = arith.constant 178 : index
    %614 = memref.load %arg1[%c178] : memref<193xf32, #tpu.memory_space<smem>>
    %615 = vector.broadcast %614 : f32 to vector<8x128xf32>
    %616 = arith.mulf %615, %613 : vector<8x128xf32>
    %617 = arith.addf %605, %616 : vector<8x128xf32>
    %c51 = arith.constant 51 : index
    %618 = memref.load %arg1[%c51] : memref<193xf32, #tpu.memory_space<smem>>
    %619 = vector.broadcast %618 : f32 to vector<8x128xf32>
    %620 = arith.mulf %619, %3 : vector<8x128xf32>
    %c115 = arith.constant 115 : index
    %621 = memref.load %arg1[%c115] : memref<193xf32, #tpu.memory_space<smem>>
    %622 = vector.broadcast %621 : f32 to vector<8x128xf32>
    %623 = arith.addf %620, %622 : vector<8x128xf32>
    %cst_51 = arith.constant 0.000000e+00 : f32
    %624 = vector.broadcast %cst_51 : f32 to vector<8x128xf32>
    %625 = arith.maximumf %623, %624 : vector<8x128xf32>
    %c179 = arith.constant 179 : index
    %626 = memref.load %arg1[%c179] : memref<193xf32, #tpu.memory_space<smem>>
    %627 = vector.broadcast %626 : f32 to vector<8x128xf32>
    %628 = arith.mulf %627, %625 : vector<8x128xf32>
    %629 = arith.addf %617, %628 : vector<8x128xf32>
    %c52 = arith.constant 52 : index
    %630 = memref.load %arg1[%c52] : memref<193xf32, #tpu.memory_space<smem>>
    %631 = vector.broadcast %630 : f32 to vector<8x128xf32>
    %632 = arith.mulf %631, %3 : vector<8x128xf32>
    %c116 = arith.constant 116 : index
    %633 = memref.load %arg1[%c116] : memref<193xf32, #tpu.memory_space<smem>>
    %634 = vector.broadcast %633 : f32 to vector<8x128xf32>
    %635 = arith.addf %632, %634 : vector<8x128xf32>
    %cst_52 = arith.constant 0.000000e+00 : f32
    %636 = vector.broadcast %cst_52 : f32 to vector<8x128xf32>
    %637 = arith.maximumf %635, %636 : vector<8x128xf32>
    %c180 = arith.constant 180 : index
    %638 = memref.load %arg1[%c180] : memref<193xf32, #tpu.memory_space<smem>>
    %639 = vector.broadcast %638 : f32 to vector<8x128xf32>
    %640 = arith.mulf %639, %637 : vector<8x128xf32>
    %641 = arith.addf %629, %640 : vector<8x128xf32>
    %c53 = arith.constant 53 : index
    %642 = memref.load %arg1[%c53] : memref<193xf32, #tpu.memory_space<smem>>
    %643 = vector.broadcast %642 : f32 to vector<8x128xf32>
    %644 = arith.mulf %643, %3 : vector<8x128xf32>
    %c117 = arith.constant 117 : index
    %645 = memref.load %arg1[%c117] : memref<193xf32, #tpu.memory_space<smem>>
    %646 = vector.broadcast %645 : f32 to vector<8x128xf32>
    %647 = arith.addf %644, %646 : vector<8x128xf32>
    %cst_53 = arith.constant 0.000000e+00 : f32
    %648 = vector.broadcast %cst_53 : f32 to vector<8x128xf32>
    %649 = arith.maximumf %647, %648 : vector<8x128xf32>
    %c181 = arith.constant 181 : index
    %650 = memref.load %arg1[%c181] : memref<193xf32, #tpu.memory_space<smem>>
    %651 = vector.broadcast %650 : f32 to vector<8x128xf32>
    %652 = arith.mulf %651, %649 : vector<8x128xf32>
    %653 = arith.addf %641, %652 : vector<8x128xf32>
    %c54 = arith.constant 54 : index
    %654 = memref.load %arg1[%c54] : memref<193xf32, #tpu.memory_space<smem>>
    %655 = vector.broadcast %654 : f32 to vector<8x128xf32>
    %656 = arith.mulf %655, %3 : vector<8x128xf32>
    %c118 = arith.constant 118 : index
    %657 = memref.load %arg1[%c118] : memref<193xf32, #tpu.memory_space<smem>>
    %658 = vector.broadcast %657 : f32 to vector<8x128xf32>
    %659 = arith.addf %656, %658 : vector<8x128xf32>
    %cst_54 = arith.constant 0.000000e+00 : f32
    %660 = vector.broadcast %cst_54 : f32 to vector<8x128xf32>
    %661 = arith.maximumf %659, %660 : vector<8x128xf32>
    %c182 = arith.constant 182 : index
    %662 = memref.load %arg1[%c182] : memref<193xf32, #tpu.memory_space<smem>>
    %663 = vector.broadcast %662 : f32 to vector<8x128xf32>
    %664 = arith.mulf %663, %661 : vector<8x128xf32>
    %665 = arith.addf %653, %664 : vector<8x128xf32>
    %c55 = arith.constant 55 : index
    %666 = memref.load %arg1[%c55] : memref<193xf32, #tpu.memory_space<smem>>
    %667 = vector.broadcast %666 : f32 to vector<8x128xf32>
    %668 = arith.mulf %667, %3 : vector<8x128xf32>
    %c119 = arith.constant 119 : index
    %669 = memref.load %arg1[%c119] : memref<193xf32, #tpu.memory_space<smem>>
    %670 = vector.broadcast %669 : f32 to vector<8x128xf32>
    %671 = arith.addf %668, %670 : vector<8x128xf32>
    %cst_55 = arith.constant 0.000000e+00 : f32
    %672 = vector.broadcast %cst_55 : f32 to vector<8x128xf32>
    %673 = arith.maximumf %671, %672 : vector<8x128xf32>
    %c183 = arith.constant 183 : index
    %674 = memref.load %arg1[%c183] : memref<193xf32, #tpu.memory_space<smem>>
    %675 = vector.broadcast %674 : f32 to vector<8x128xf32>
    %676 = arith.mulf %675, %673 : vector<8x128xf32>
    %677 = arith.addf %665, %676 : vector<8x128xf32>
    %c56 = arith.constant 56 : index
    %678 = memref.load %arg1[%c56] : memref<193xf32, #tpu.memory_space<smem>>
    %679 = vector.broadcast %678 : f32 to vector<8x128xf32>
    %680 = arith.mulf %679, %3 : vector<8x128xf32>
    %c120 = arith.constant 120 : index
    %681 = memref.load %arg1[%c120] : memref<193xf32, #tpu.memory_space<smem>>
    %682 = vector.broadcast %681 : f32 to vector<8x128xf32>
    %683 = arith.addf %680, %682 : vector<8x128xf32>
    %cst_56 = arith.constant 0.000000e+00 : f32
    %684 = vector.broadcast %cst_56 : f32 to vector<8x128xf32>
    %685 = arith.maximumf %683, %684 : vector<8x128xf32>
    %c184 = arith.constant 184 : index
    %686 = memref.load %arg1[%c184] : memref<193xf32, #tpu.memory_space<smem>>
    %687 = vector.broadcast %686 : f32 to vector<8x128xf32>
    %688 = arith.mulf %687, %685 : vector<8x128xf32>
    %689 = arith.addf %677, %688 : vector<8x128xf32>
    %c57 = arith.constant 57 : index
    %690 = memref.load %arg1[%c57] : memref<193xf32, #tpu.memory_space<smem>>
    %691 = vector.broadcast %690 : f32 to vector<8x128xf32>
    %692 = arith.mulf %691, %3 : vector<8x128xf32>
    %c121 = arith.constant 121 : index
    %693 = memref.load %arg1[%c121] : memref<193xf32, #tpu.memory_space<smem>>
    %694 = vector.broadcast %693 : f32 to vector<8x128xf32>
    %695 = arith.addf %692, %694 : vector<8x128xf32>
    %cst_57 = arith.constant 0.000000e+00 : f32
    %696 = vector.broadcast %cst_57 : f32 to vector<8x128xf32>
    %697 = arith.maximumf %695, %696 : vector<8x128xf32>
    %c185 = arith.constant 185 : index
    %698 = memref.load %arg1[%c185] : memref<193xf32, #tpu.memory_space<smem>>
    %699 = vector.broadcast %698 : f32 to vector<8x128xf32>
    %700 = arith.mulf %699, %697 : vector<8x128xf32>
    %701 = arith.addf %689, %700 : vector<8x128xf32>
    %c58 = arith.constant 58 : index
    %702 = memref.load %arg1[%c58] : memref<193xf32, #tpu.memory_space<smem>>
    %703 = vector.broadcast %702 : f32 to vector<8x128xf32>
    %704 = arith.mulf %703, %3 : vector<8x128xf32>
    %c122 = arith.constant 122 : index
    %705 = memref.load %arg1[%c122] : memref<193xf32, #tpu.memory_space<smem>>
    %706 = vector.broadcast %705 : f32 to vector<8x128xf32>
    %707 = arith.addf %704, %706 : vector<8x128xf32>
    %cst_58 = arith.constant 0.000000e+00 : f32
    %708 = vector.broadcast %cst_58 : f32 to vector<8x128xf32>
    %709 = arith.maximumf %707, %708 : vector<8x128xf32>
    %c186 = arith.constant 186 : index
    %710 = memref.load %arg1[%c186] : memref<193xf32, #tpu.memory_space<smem>>
    %711 = vector.broadcast %710 : f32 to vector<8x128xf32>
    %712 = arith.mulf %711, %709 : vector<8x128xf32>
    %713 = arith.addf %701, %712 : vector<8x128xf32>
    %c59 = arith.constant 59 : index
    %714 = memref.load %arg1[%c59] : memref<193xf32, #tpu.memory_space<smem>>
    %715 = vector.broadcast %714 : f32 to vector<8x128xf32>
    %716 = arith.mulf %715, %3 : vector<8x128xf32>
    %c123 = arith.constant 123 : index
    %717 = memref.load %arg1[%c123] : memref<193xf32, #tpu.memory_space<smem>>
    %718 = vector.broadcast %717 : f32 to vector<8x128xf32>
    %719 = arith.addf %716, %718 : vector<8x128xf32>
    %cst_59 = arith.constant 0.000000e+00 : f32
    %720 = vector.broadcast %cst_59 : f32 to vector<8x128xf32>
    %721 = arith.maximumf %719, %720 : vector<8x128xf32>
    %c187 = arith.constant 187 : index
    %722 = memref.load %arg1[%c187] : memref<193xf32, #tpu.memory_space<smem>>
    %723 = vector.broadcast %722 : f32 to vector<8x128xf32>
    %724 = arith.mulf %723, %721 : vector<8x128xf32>
    %725 = arith.addf %713, %724 : vector<8x128xf32>
    %c60 = arith.constant 60 : index
    %726 = memref.load %arg1[%c60] : memref<193xf32, #tpu.memory_space<smem>>
    %727 = vector.broadcast %726 : f32 to vector<8x128xf32>
    %728 = arith.mulf %727, %3 : vector<8x128xf32>
    %c124 = arith.constant 124 : index
    %729 = memref.load %arg1[%c124] : memref<193xf32, #tpu.memory_space<smem>>
    %730 = vector.broadcast %729 : f32 to vector<8x128xf32>
    %731 = arith.addf %728, %730 : vector<8x128xf32>
    %cst_60 = arith.constant 0.000000e+00 : f32
    %732 = vector.broadcast %cst_60 : f32 to vector<8x128xf32>
    %733 = arith.maximumf %731, %732 : vector<8x128xf32>
    %c188 = arith.constant 188 : index
    %734 = memref.load %arg1[%c188] : memref<193xf32, #tpu.memory_space<smem>>
    %735 = vector.broadcast %734 : f32 to vector<8x128xf32>
    %736 = arith.mulf %735, %733 : vector<8x128xf32>
    %737 = arith.addf %725, %736 : vector<8x128xf32>
    %c61 = arith.constant 61 : index
    %738 = memref.load %arg1[%c61] : memref<193xf32, #tpu.memory_space<smem>>
    %739 = vector.broadcast %738 : f32 to vector<8x128xf32>
    %740 = arith.mulf %739, %3 : vector<8x128xf32>
    %c125 = arith.constant 125 : index
    %741 = memref.load %arg1[%c125] : memref<193xf32, #tpu.memory_space<smem>>
    %742 = vector.broadcast %741 : f32 to vector<8x128xf32>
    %743 = arith.addf %740, %742 : vector<8x128xf32>
    %cst_61 = arith.constant 0.000000e+00 : f32
    %744 = vector.broadcast %cst_61 : f32 to vector<8x128xf32>
    %745 = arith.maximumf %743, %744 : vector<8x128xf32>
    %c189 = arith.constant 189 : index
    %746 = memref.load %arg1[%c189] : memref<193xf32, #tpu.memory_space<smem>>
    %747 = vector.broadcast %746 : f32 to vector<8x128xf32>
    %748 = arith.mulf %747, %745 : vector<8x128xf32>
    %749 = arith.addf %737, %748 : vector<8x128xf32>
    %c62 = arith.constant 62 : index
    %750 = memref.load %arg1[%c62] : memref<193xf32, #tpu.memory_space<smem>>
    %751 = vector.broadcast %750 : f32 to vector<8x128xf32>
    %752 = arith.mulf %751, %3 : vector<8x128xf32>
    %c126 = arith.constant 126 : index
    %753 = memref.load %arg1[%c126] : memref<193xf32, #tpu.memory_space<smem>>
    %754 = vector.broadcast %753 : f32 to vector<8x128xf32>
    %755 = arith.addf %752, %754 : vector<8x128xf32>
    %cst_62 = arith.constant 0.000000e+00 : f32
    %756 = vector.broadcast %cst_62 : f32 to vector<8x128xf32>
    %757 = arith.maximumf %755, %756 : vector<8x128xf32>
    %c190 = arith.constant 190 : index
    %758 = memref.load %arg1[%c190] : memref<193xf32, #tpu.memory_space<smem>>
    %759 = vector.broadcast %758 : f32 to vector<8x128xf32>
    %760 = arith.mulf %759, %757 : vector<8x128xf32>
    %761 = arith.addf %749, %760 : vector<8x128xf32>
    %c63 = arith.constant 63 : index
    %762 = memref.load %arg1[%c63] : memref<193xf32, #tpu.memory_space<smem>>
    %763 = vector.broadcast %762 : f32 to vector<8x128xf32>
    %764 = arith.mulf %763, %3 : vector<8x128xf32>
    %c127 = arith.constant 127 : index
    %765 = memref.load %arg1[%c127] : memref<193xf32, #tpu.memory_space<smem>>
    %766 = vector.broadcast %765 : f32 to vector<8x128xf32>
    %767 = arith.addf %764, %766 : vector<8x128xf32>
    %cst_63 = arith.constant 0.000000e+00 : f32
    %768 = vector.broadcast %cst_63 : f32 to vector<8x128xf32>
    %769 = arith.maximumf %767, %768 : vector<8x128xf32>
    %c191 = arith.constant 191 : index
    %770 = memref.load %arg1[%c191] : memref<193xf32, #tpu.memory_space<smem>>
    %771 = vector.broadcast %770 : f32 to vector<8x128xf32>
    %772 = arith.mulf %771, %769 : vector<8x128xf32>
    %773 = arith.addf %761, %772 : vector<8x128xf32>
    %c0_64 = arith.constant 0 : index
    %774 = arith.index_cast %1 : i32 to index
    %775 = vector.load %arg3[%c0_64, %774] : memref<8x128xf32, #tpu.memory_space<vmem>>, vector<8x128xf32>
    tpu.vector_store %arg3[%c0_64, %774], %773 {strides = array<i32>} : memref<8x128xf32, #tpu.memory_space<vmem>>, vector<8x128xf32>,
    %c1_i32 = arith.constant 1 : i32
    return
  }
  func.func @transform_0(%arg0: i32) -> i32 {
    %c0_i32 = arith.constant 0 : i32
    %c0_i32_0 = arith.constant 0 : i32
    return %c0_i32 : i32
  }
  func.func @transform_1(%arg0: i32) -> (i32, i32) {
    %c0_i32 = arith.constant 0 : i32
    %c0_i32_0 = arith.constant 0 : i32
    return %c0_i32, %arg0 : i32, i32
  }
  func.func @transform_2(%arg0: i32) -> (i32, i32) {
    %c0_i32 = arith.constant 0 : i32
    %c0_i32_0 = arith.constant 0 : i32
    return %c0_i32, %arg0 : i32, i32
  }
}

</mosaic_0001>

<llo_original>
// kernel: tpu_custom_call.1
$region0: #{tpu_custom_call.1}
  #allocation0 [shape = 'u32[]', space=smem, size = 0x4, offset = 0x4, fixed_abs, tag = 'smem constant byte address 0x4 - core index']
  #allocation1 [shape = 'u32[144,128]{1,0:T(1,128)}', space=vmem, size = 0x12000, scoped, tag = 'internal scratch']
  %s0 = inlined_call_operand.hbm [shape: f32[193], index: 0, kind: input, shape index: {}]
  %s1 = inlined_call_operand.hbm [shape: f32[8,128], index: 1, kind: input, shape index: {}]
  %s2 = inlined_call_operand.hbm [shape: f32[8,128], index: 2, kind: output, shape index: {}]
  %s3 = sld [smem:[#allocation0]]
  $region26: #{tpu_custom_call.1} parent=0
    _
  %s5 = ssub.s32 1, %s3
  %s6 = scalar_select 0, %s5, %s3
  $region1: #{tpu_custom_call.1} parent=0
    #allocation2 [shape = 'u8[1024]{0}', space=smem, size = 0x400, scoped, tag = 'input window, operand 0, single buffered']
    #allocation3 [shape = 's32[1]{0}', space=sflag, size = 0x4, scoped, tag = 'scoped memory for tpu_custom_call.1']
    #allocation4 [shape = 's32[1]{0}', space=sflag, size = 0x4, scoped, tag = 'scoped memory for tpu_custom_call.1']
    #allocation5 [shape = 's32[1]{0}', space=sflag, size = 0x4, scoped, tag = 'scoped memory for tpu_custom_call.1']
    #allocation6 [shape = 'u8[4096]{0}', space=vmem, size = 0x1000, scoped, tag = 'input window, operand 1, single buffered']
    #allocation7 [shape = 'u8[4096]{0}', space=vmem, size = 0x1000, scoped, tag = 'output window, operand 0, single buffered']
    %7 = vsyncpa [#allocation5], 0
    %8 = vsyncpa [#allocation3], 0
    %9 = vsyncpa [#allocation4], 0
    // Predicated region
    $region2: #{tpu_custom_call.1} parent=1 // pred_check
      _
    $region3: #{tpu_custom_call.1} parent=1 // pred_check_branch
      %11 = sbr.rel (0) target = $region5
    $region4: #{tpu_custom_call.1} parent=1 // pred_region
      %s13 = ssub.s32 32, 32
      %14 = vsyncadd [#allocation5], %s13
      %17 = dma.hbm_to_smem %s0, 32, [#allocation2], [#allocation5]
    $region5: #{tpu_custom_call.1} parent=1 // pred_fallthru
      _
    // Predicated region
    $region6: #{tpu_custom_call.1} parent=1 // pred_check
      _
    $region7: #{tpu_custom_call.1} parent=1 // pred_check_branch
      %19 = sbr.rel (0) target = $region9
    $region8: #{tpu_custom_call.1} parent=1 // pred_region
      %s21 = ssub.s32 128, 128
      %22 = vsyncadd [#allocation3], %s21
      %s24 = sshll.u32 [#allocation6], 4
      %s25 = int_to_ptr.vmem [resolvable:$true] %s24
      %27 = dma.hbm_to_vmem [thread:$0]  %s1, 128, %s25, [#allocation3]
    $region9: #{tpu_custom_call.1} parent=1 // pred_fallthru
      _
    // Predicated region
    $region10: #{tpu_custom_call.1} parent=1 // pred_check
      _
    $region11: #{tpu_custom_call.1} parent=1 // pred_check_branch
      %29 = sbr.rel (0) target = $region13
    $region12: #{tpu_custom_call.1} parent=1 // pred_region
      %30 = dma.done [#allocation5], 32
    $region13: #{tpu_custom_call.1} parent=1 // pred_fallthru
      _
    // Predicated region
    $region14: #{tpu_custom_call.1} parent=1 // pred_check
      _
    $region15: #{tpu_custom_call.1} parent=1 // pred_check_branch
      %32 = sbr.rel (0) target = $region17
    $region16: #{tpu_custom_call.1} parent=1 // pred_region
      %33 = dma.done [#allocation3], 128
    $region17: #{tpu_custom_call.1} parent=1 // pred_fallthru
      _
    %34 = sfence
    %v35 = vld [vmem:[#allocation6] sm:$0xff]
    %s36 = sld [smem:[#allocation2 + $0xc0]]
    %v37 = vstv %s36
    %s38 = sld [smem:[#allocation2]]
    %v39 = vstv %s38
    %v40 = vmul.f32 %v39, %v35
    %s41 = sld [smem:[#allocation2 + $0x40]]
    %v42 = vstv %s41
    %v43 = vadd.f32 %v40, %v42
    %v44 = vmax.f32 %v43, 0.0
    %s45 = sld [smem:[#allocation2 + $0x80]]
    %v46 = vstv %s45
    %v47 = vmul.f32 %v46, %v44
    %v48 = vadd.f32 %v37, %v47
    %s49 = sld [smem:[#allocation2 + $0x1]]
    %v50 = vstv %s49
    %v51 = vmul.f32 %v50, %v35
    %s52 = sld [smem:[#allocation2 + $0x41]]
    %v53 = vstv %s52
    %v54 = vadd.f32 %v51, %v53
    %v55 = vmax.f32 %v54, 0.0
    %s56 = sld [smem:[#allocation2 + $0x81]]
    %v57 = vstv %s56
    %v58 = vmul.f32 %v57, %v55
    %v59 = vadd.f32 %v48, %v58
    %s60 = sld [smem:[#allocation2 + $0x2]]
    %v61 = vstv %s60
    %v62 = vmul.f32 %v61, %v35
    %s63 = sld [smem:[#allocation2 + $0x42]]
    %v64 = vstv %s63
    %v65 = vadd.f32 %v62, %v64
    %v66 = vmax.f32 %v65, 0.0
    %s67 = sld [smem:[#allocation2 + $0x82]]
    %v68 = vstv %s67
    %v69 = vmul.f32 %v68, %v66
    %v70 = vadd.f32 %v59, %v69
    %s71 = sld [smem:[#allocation2 + $0x3]]
    %v72 = vstv %s71
    %v73 = vmul.f32 %v72, %v35
    %s74 = sld [smem:[#allocation2 + $0x43]]
    %v75 = vstv %s74
    %v76 = vadd.f32 %v73, %v75
    %v77 = vmax.f32 %v76, 0.0
    %s78 = sld [smem:[#allocation2 + $0x83]]
    %v79 = vstv %s78
    %v80 = vmul.f32 %v79, %v77
    %v81 = vadd.f32 %v70, %v80
    %s82 = sld [smem:[#allocation2 + $0x4]]
    %v83 = vstv %s82
    %v84 = vmul.f32 %v83, %v35
    %s85 = sld [smem:[#allocation2 + $0x44]]
    %v86 = vstv %s85
    %v87 = vadd.f32 %v84, %v86
    %v88 = vmax.f32 %v87, 0.0
    %s89 = sld [smem:[#allocation2 + $0x84]]
    %v90 = vstv %s89
    %v91 = vmul.f32 %v90, %v88
    %v92 = vadd.f32 %v81, %v91
    %s93 = sld [smem:[#allocation2 + $0x5]]
    %v94 = vstv %s93
    %v95 = vmul.f32 %v94, %v35
    %s96 = sld [smem:[#allocation2 + $0x45]]
    %v97 = vstv %s96
    %v98 = vadd.f32 %v95, %v97
    %v99 = vmax.f32 %v98, 0.0
    %s100 = sld [smem:[#allocation2 + $0x85]]
    %v101 = vstv %s100
    %v102 = vmul.f32 %v101, %v99
    %v103 = vadd.f32 %v92, %v102
    %s104 = sld [smem:[#allocation2 + $0x6]]
    %v105 = vstv %s104
    %v106 = vmul.f32 %v105, %v35
    %s107 = sld [smem:[#allocation2 + $0x46]]
    %v108 = vstv %s107
    %v109 = vadd.f32 %v106, %v108
    %v110 = vmax.f32 %v109, 0.0
    %s111 = sld [smem:[#allocation2 + $0x86]]
    %v112 = vstv %s111
    %v113 = vmul.f32 %v112, %v110
    %v114 = vadd.f32 %v103, %v113
    %s115 = sld [smem:[#allocation2 + $0x7]]
    %v116 = vstv %s115
    %v117 = vmul.f32 %v116, %v35
    %s118 = sld [smem:[#allocation2 + $0x47]]
    %v119 = vstv %s118
    %v120 = vadd.f32 %v117, %v119
    %v121 = vmax.f32 %v120, 0.0
    %s122 = sld [smem:[#allocation2 + $0x87]]
    %v123 = vstv %s122
    %v124 = vmul.f32 %v123, %v121
    %v125 = vadd.f32 %v114, %v124
    %s126 = sld [smem:[#allocation2 + $0x8]]
    %v127 = vstv %s126
    %v128 = vmul.f32 %v127, %v35
    %s129 = sld [smem:[#allocation2 + $0x48]]
    %v130 = vstv %s129
    %v131 = vadd.f32 %v128, %v130
    %v132 = vmax.f32 %v131, 0.0
    %s133 = sld [smem:[#allocation2 + $0x88]]
    %v134 = vstv %s133
    %v135 = vmul.f32 %v134, %v132
    %v136 = vadd.f32 %v125, %v135
    %s137 = sld [smem:[#allocation2 + $0x9]]
    %v138 = vstv %s137
    %v139 = vmul.f32 %v138, %v35
    %s140 = sld [smem:[#allocation2 + $0x49]]
    %v141 = vstv %s140
    %v142 = vadd.f32 %v139, %v141
    %v143 = vmax.f32 %v142, 0.0
    %s144 = sld [smem:[#allocation2 + $0x89]]
    %v145 = vstv %s144
    %v146 = vmul.f32 %v145, %v143
    %v147 = vadd.f32 %v136, %v146
    %s148 = sld [smem:[#allocation2 + $0xa]]
    %v149 = vstv %s148
    %v150 = vmul.f32 %v149, %v35
    %s151 = sld [smem:[#allocation2 + $0x4a]]
    %v152 = vstv %s151
    %v153 = vadd.f32 %v150, %v152
    %v154 = vmax.f32 %v153, 0.0
    %s155 = sld [smem:[#allocation2 + $0x8a]]
    %v156 = vstv %s155
    %v157 = vmul.f32 %v156, %v154
    %v158 = vadd.f32 %v147, %v157
    %s159 = sld [smem:[#allocation2 + $0xb]]
    %v160 = vstv %s159
    %v161 = vmul.f32 %v160, %v35
    %s162 = sld [smem:[#allocation2 + $0x4b]]
    %v163 = vstv %s162
    %v164 = vadd.f32 %v161, %v163
    %v165 = vmax.f32 %v164, 0.0
    %s166 = sld [smem:[#allocation2 + $0x8b]]
    %v167 = vstv %s166
    %v168 = vmul.f32 %v167, %v165
    %v169 = vadd.f32 %v158, %v168
    %s170 = sld [smem:[#allocation2 + $0xc]]
    %v171 = vstv %s170
    %v172 = vmul.f32 %v171, %v35
    %s173 = sld [smem:[#allocation2 + $0x4c]]
    %v174 = vstv %s173
    %v175 = vadd.f32 %v172, %v174
    %v176 = vmax.f32 %v175, 0.0
    %s177 = sld [smem:[#allocation2 + $0x8c]]
    %v178 = vstv %s177
    %v179 = vmul.f32 %v178, %v176
    %v180 = vadd.f32 %v169, %v179
    %s181 = sld [smem:[#allocation2 + $0xd]]
    %v182 = vstv %s181
    %v183 = vmul.f32 %v182, %v35
    %s184 = sld [smem:[#allocation2 + $0x4d]]
    %v185 = vstv %s184
    %v186 = vadd.f32 %v183, %v185
    %v187 = vmax.f32 %v186, 0.0
    %s188 = sld [smem:[#allocation2 + $0x8d]]
    %v189 = vstv %s188
    %v190 = vmul.f32 %v189, %v187
    %v191 = vadd.f32 %v180, %v190
    %s192 = sld [smem:[#allocation2 + $0xe]]
    %v193 = vstv %s192
    %v194 = vmul.f32 %v193, %v35
    %s195 = sld [smem:[#allocation2 + $0x4e]]
    %v196 = vstv %s195
    %v197 = vadd.f32 %v194, %v196
    %v198 = vmax.f32 %v197, 0.0
    %s199 = sld [smem:[#allocation2 + $0x8e]]
    %v200 = vstv %s199
    %v201 = vmul.f32 %v200, %v198
    %v202 = vadd.f32 %v191, %v201
    %s203 = sld [smem:[#allocation2 + $0xf]]
    %v204 = vstv %s203
    %v205 = vmul.f32 %v204, %v35
    %s206 = sld [smem:[#allocation2 + $0x4f]]
    %v207 = vstv %s206
    %v208 = vadd.f32 %v205, %v207
    %v209 = vmax.f32 %v208, 0.0
    %s210 = sld [smem:[#allocation2 + $0x8f]]
    %v211 = vstv %s210
    %v212 = vmul.f32 %v211, %v209
    %v213 = vadd.f32 %v202, %v212
    %s214 = sld [smem:[#allocation2 + $0x10]]
    %v215 = vstv %s214
    %v216 = vmul.f32 %v215, %v35
    %s217 = sld [smem:[#allocation2 + $0x50]]
    %v218 = vstv %s217
    %v219 = vadd.f32 %v216, %v218
    %v220 = vmax.f32 %v219, 0.0
    %s221 = sld [smem:[#allocation2 + $0x90]]
    %v222 = vstv %s221
    %v223 = vmul.f32 %v222, %v220
    %v224 = vadd.f32 %v213, %v223
    %s225 = sld [smem:[#allocation2 + $0x11]]
    %v226 = vstv %s225
    %v227 = vmul.f32 %v226, %v35
    %s228 = sld [smem:[#allocation2 + $0x51]]
    %v229 = vstv %s228
    %v230 = vadd.f32 %v227, %v229
    %v231 = vmax.f32 %v230, 0.0
    %s232 = sld [smem:[#allocation2 + $0x91]]
    %v233 = vstv %s232
    %v234 = vmul.f32 %v233, %v231
    %v235 = vadd.f32 %v224, %v234
    %s236 = sld [smem:[#allocation2 + $0x12]]
    %v237 = vstv %s236
    %v238 = vmul.f32 %v237, %v35
    %s239 = sld [smem:[#allocation2 + $0x52]]
    %v240 = vstv %s239
    %v241 = vadd.f32 %v238, %v240
    %v242 = vmax.f32 %v241, 0.0
    %s243 = sld [smem:[#allocation2 + $0x92]]
    %v244 = vstv %s243
    %v245 = vmul.f32 %v244, %v242
    %v246 = vadd.f32 %v235, %v245
    %s247 = sld [smem:[#allocation2 + $0x13]]
    %v248 = vstv %s247
    %v249 = vmul.f32 %v248, %v35
    %s250 = sld [smem:[#allocation2 + $0x53]]
    %v251 = vstv %s250
    %v252 = vadd.f32 %v249, %v251
    %v253 = vmax.f32 %v252, 0.0
    %s254 = sld [smem:[#allocation2 + $0x93]]
    %v255 = vstv %s254
    %v256 = vmul.f32 %v255, %v253
    %v257 = vadd.f32 %v246, %v256
    %s258 = sld [smem:[#allocation2 + $0x14]]
    %v259 = vstv %s258
    %v260 = vmul.f32 %v259, %v35
    %s261 = sld [smem:[#allocation2 + $0x54]]
    %v262 = vstv %s261
    %v263 = vadd.f32 %v260, %v262
    %v264 = vmax.f32 %v263, 0.0
    %s265 = sld [smem:[#allocation2 + $0x94]]
    %v266 = vstv %s265
    %v267 = vmul.f32 %v266, %v264
    %v268 = vadd.f32 %v257, %v267
    %s269 = sld [smem:[#allocation2 + $0x15]]
    %v270 = vstv %s269
    %v271 = vmul.f32 %v270, %v35
    %s272 = sld [smem:[#allocation2 + $0x55]]
    %v273 = vstv %s272
    %v274 = vadd.f32 %v271, %v273
    %v275 = vmax.f32 %v274, 0.0
    %s276 = sld [smem:[#allocation2 + $0x95]]
    %v277 = vstv %s276
    %v278 = vmul.f32 %v277, %v275
    %v279 = vadd.f32 %v268, %v278
    %s280 = sld [smem:[#allocation2 + $0x16]]
    %v281 = vstv %s280
    %v282 = vmul.f32 %v281, %v35
    %s283 = sld [smem:[#allocation2 + $0x56]]
    %v284 = vstv %s283
    %v285 = vadd.f32 %v282, %v284
    %v286 = vmax.f32 %v285, 0.0
    %s287 = sld [smem:[#allocation2 + $0x96]]
    %v288 = vstv %s287
    %v289 = vmul.f32 %v288, %v286
    %v290 = vadd.f32 %v279, %v289
    %s291 = sld [smem:[#allocation2 + $0x17]]
    %v292 = vstv %s291
    %v293 = vmul.f32 %v292, %v35
    %s294 = sld [smem:[#allocation2 + $0x57]]
    %v295 = vstv %s294
    %v296 = vadd.f32 %v293, %v295
    %v297 = vmax.f32 %v296, 0.0
    %s298 = sld [smem:[#allocation2 + $0x97]]
    %v299 = vstv %s298
    %v300 = vmul.f32 %v299, %v297
    %v301 = vadd.f32 %v290, %v300
    %s302 = sld [smem:[#allocation2 + $0x18]]
    %v303 = vstv %s302
    %v304 = vmul.f32 %v303, %v35
    %s305 = sld [smem:[#allocation2 + $0x58]]
    %v306 = vstv %s305
    %v307 = vadd.f32 %v304, %v306
    %v308 = vmax.f32 %v307, 0.0
    %s309 = sld [smem:[#allocation2 + $0x98]]
    %v310 = vstv %s309
    %v311 = vmul.f32 %v310, %v308
    %v312 = vadd.f32 %v301, %v311
    %s313 = sld [smem:[#allocation2 + $0x19]]
    %v314 = vstv %s313
    %v315 = vmul.f32 %v314, %v35
    %s316 = sld [smem:[#allocation2 + $0x59]]
    %v317 = vstv %s316
    %v318 = vadd.f32 %v315, %v317
    %v319 = vmax.f32 %v318, 0.0
    %s320 = sld [smem:[#allocation2 + $0x99]]
    %v321 = vstv %s320
    %v322 = vmul.f32 %v321, %v319
    %v323 = vadd.f32 %v312, %v322
    %s324 = sld [smem:[#allocation2 + $0x1a]]
    %v325 = vstv %s324
    %v326 = vmul.f32 %v325, %v35
    %s327 = sld [smem:[#allocation2 + $0x5a]]
    %v328 = vstv %s327
    %v329 = vadd.f32 %v326, %v328
    %v330 = vmax.f32 %v329, 0.0
    %s331 = sld [smem:[#allocation2 + $0x9a]]
    %v332 = vstv %s331
    %v333 = vmul.f32 %v332, %v330
    %v334 = vadd.f32 %v323, %v333
    %s335 = sld [smem:[#allocation2 + $0x1b]]
    %v336 = vstv %s335
    %v337 = vmul.f32 %v336, %v35
    %s338 = sld [smem:[#allocation2 + $0x5b]]
    %v339 = vstv %s338
    %v340 = vadd.f32 %v337, %v339
    %v341 = vmax.f32 %v340, 0.0
    %s342 = sld [smem:[#allocation2 + $0x9b]]
    %v343 = vstv %s342
    %v344 = vmul.f32 %v343, %v341
    %v345 = vadd.f32 %v334, %v344
    %s346 = sld [smem:[#allocation2 + $0x1c]]
    %v347 = vstv %s346
    %v348 = vmul.f32 %v347, %v35
    %s349 = sld [smem:[#allocation2 + $0x5c]]
    %v350 = vstv %s349
    %v351 = vadd.f32 %v348, %v350
    %v352 = vmax.f32 %v351, 0.0
    %s353 = sld [smem:[#allocation2 + $0x9c]]
    %v354 = vstv %s353
    %v355 = vmul.f32 %v354, %v352
    %v356 = vadd.f32 %v345, %v355
    %s357 = sld [smem:[#allocation2 + $0x1d]]
    %v358 = vstv %s357
    %v359 = vmul.f32 %v358, %v35
    %s360 = sld [smem:[#allocation2 + $0x5d]]
    %v361 = vstv %s360
    %v362 = vadd.f32 %v359, %v361
    %v363 = vmax.f32 %v362, 0.0
    %s364 = sld [smem:[#allocation2 + $0x9d]]
    %v365 = vstv %s364
    %v366 = vmul.f32 %v365, %v363
    %v367 = vadd.f32 %v356, %v366
    %s368 = sld [smem:[#allocation2 + $0x1e]]
    %v369 = vstv %s368
    %v370 = vmul.f32 %v369, %v35
    %s371 = sld [smem:[#allocation2 + $0x5e]]
    %v372 = vstv %s371
    %v373 = vadd.f32 %v370, %v372
    %v374 = vmax.f32 %v373, 0.0
    %s375 = sld [smem:[#allocation2 + $0x9e]]
    %v376 = vstv %s375
    %v377 = vmul.f32 %v376, %v374
    %v378 = vadd.f32 %v367, %v377
    %s379 = sld [smem:[#allocation2 + $0x1f]]
    %v380 = vstv %s379
    %v381 = vmul.f32 %v380, %v35
    %s382 = sld [smem:[#allocation2 + $0x5f]]
    %v383 = vstv %s382
    %v384 = vadd.f32 %v381, %v383
    %v385 = vmax.f32 %v384, 0.0
    %s386 = sld [smem:[#allocation2 + $0x9f]]
    %v387 = vstv %s386
    %v388 = vmul.f32 %v387, %v385
    %v389 = vadd.f32 %v378, %v388
    %s390 = sld [smem:[#allocation2 + $0x20]]
    %v391 = vstv %s390
    %v392 = vmul.f32 %v391, %v35
    %s393 = sld [smem:[#allocation2 + $0x60]]
    %v394 = vstv %s393
    %v395 = vadd.f32 %v392, %v394
    %v396 = vmax.f32 %v395, 0.0
    %s397 = sld [smem:[#allocation2 + $0xa0]]
    %v398 = vstv %s397
    %v399 = vmul.f32 %v398, %v396
    %v400 = vadd.f32 %v389, %v399
    %s401 = sld [smem:[#allocation2 + $0x21]]
    %v402 = vstv %s401
    %v403 = vmul.f32 %v402, %v35
    %s404 = sld [smem:[#allocation2 + $0x61]]
    %v405 = vstv %s404
    %v406 = vadd.f32 %v403, %v405
    %v407 = vmax.f32 %v406, 0.0
    %s408 = sld [smem:[#allocation2 + $0xa1]]
    %v409 = vstv %s408
    %v410 = vmul.f32 %v409, %v407
    %v411 = vadd.f32 %v400, %v410
    %s412 = sld [smem:[#allocation2 + $0x22]]
    %v413 = vstv %s412
    %v414 = vmul.f32 %v413, %v35
    %s415 = sld [smem:[#allocation2 + $0x62]]
    %v416 = vstv %s415
    %v417 = vadd.f32 %v414, %v416
    %v418 = vmax.f32 %v417, 0.0
    %s419 = sld [smem:[#allocation2 + $0xa2]]
    %v420 = vstv %s419
    %v421 = vmul.f32 %v420, %v418
    %v422 = vadd.f32 %v411, %v421
    %s423 = sld [smem:[#allocation2 + $0x23]]
    %v424 = vstv %s423
    %v425 = vmul.f32 %v424, %v35
    %s426 = sld [smem:[#allocation2 + $0x63]]
    %v427 = vstv %s426
    %v428 = vadd.f32 %v425, %v427
    %v429 = vmax.f32 %v428, 0.0
    %s430 = sld [smem:[#allocation2 + $0xa3]]
    %v431 = vstv %s430
    %v432 = vmul.f32 %v431, %v429
    %v433 = vadd.f32 %v422, %v432
    %s434 = sld [smem:[#allocation2 + $0x24]]
    %v435 = vstv %s434
    %v436 = vmul.f32 %v435, %v35
    %s437 = sld [smem:[#allocation2 + $0x64]]
    %v438 = vstv %s437
    %v439 = vadd.f32 %v436, %v438
    %v440 = vmax.f32 %v439, 0.0
    %s441 = sld [smem:[#allocation2 + $0xa4]]
    %v442 = vstv %s441
    %v443 = vmul.f32 %v442, %v440
    %v444 = vadd.f32 %v433, %v443
    %s445 = sld [smem:[#allocation2 + $0x25]]
    %v446 = vstv %s445
    %v447 = vmul.f32 %v446, %v35
    %s448 = sld [smem:[#allocation2 + $0x65]]
    %v449 = vstv %s448
    %v450 = vadd.f32 %v447, %v449
    %v451 = vmax.f32 %v450, 0.0
    %s452 = sld [smem:[#allocation2 + $0xa5]]
    %v453 = vstv %s452
    %v454 = vmul.f32 %v453, %v451
    %v455 = vadd.f32 %v444, %v454
    %s456 = sld [smem:[#allocation2 + $0x26]]
    %v457 = vstv %s456
    %v458 = vmul.f32 %v457, %v35
    %s459 = sld [smem:[#allocation2 + $0x66]]
    %v460 = vstv %s459
    %v461 = vadd.f32 %v458, %v460
    %v462 = vmax.f32 %v461, 0.0
    %s463 = sld [smem:[#allocation2 + $0xa6]]
    %v464 = vstv %s463
    %v465 = vmul.f32 %v464, %v462
    %v466 = vadd.f32 %v455, %v465
    %s467 = sld [smem:[#allocation2 + $0x27]]
    %v468 = vstv %s467
    %v469 = vmul.f32 %v468, %v35
    %s470 = sld [smem:[#allocation2 + $0x67]]
    %v471 = vstv %s470
    %v472 = vadd.f32 %v469, %v471
    %v473 = vmax.f32 %v472, 0.0
    %s474 = sld [smem:[#allocation2 + $0xa7]]
    %v475 = vstv %s474
    %v476 = vmul.f32 %v475, %v473
    %v477 = vadd.f32 %v466, %v476
    %s478 = sld [smem:[#allocation2 + $0x28]]
    %v479 = vstv %s478
    %v480 = vmul.f32 %v479, %v35
    %s481 = sld [smem:[#allocation2 + $0x68]]
    %v482 = vstv %s481
    %v483 = vadd.f32 %v480, %v482
    %v484 = vmax.f32 %v483, 0.0
    %s485 = sld [smem:[#allocation2 + $0xa8]]
    %v486 = vstv %s485
    %v487 = vmul.f32 %v486, %v484
    %v488 = vadd.f32 %v477, %v487
    %s489 = sld [smem:[#allocation2 + $0x29]]
    %v490 = vstv %s489
    %v491 = vmul.f32 %v490, %v35
    %s492 = sld [smem:[#allocation2 + $0x69]]
    %v493 = vstv %s492
    %v494 = vadd.f32 %v491, %v493
    %v495 = vmax.f32 %v494, 0.0
    %s496 = sld [smem:[#allocation2 + $0xa9]]
    %v497 = vstv %s496
    %v498 = vmul.f32 %v497, %v495
    %v499 = vadd.f32 %v488, %v498
    %s500 = sld [smem:[#allocation2 + $0x2a]]
    %v501 = vstv %s500
    %v502 = vmul.f32 %v501, %v35
    %s503 = sld [smem:[#allocation2 + $0x6a]]
    %v504 = vstv %s503
    %v505 = vadd.f32 %v502, %v504
    %v506 = vmax.f32 %v505, 0.0
    %s507 = sld [smem:[#allocation2 + $0xaa]]
    %v508 = vstv %s507
    %v509 = vmul.f32 %v508, %v506
    %v510 = vadd.f32 %v499, %v509
    %s511 = sld [smem:[#allocation2 + $0x2b]]
    %v512 = vstv %s511
    %v513 = vmul.f32 %v512, %v35
    %s514 = sld [smem:[#allocation2 + $0x6b]]
    %v515 = vstv %s514
    %v516 = vadd.f32 %v513, %v515
    %v517 = vmax.f32 %v516, 0.0
    %s518 = sld [smem:[#allocation2 + $0xab]]
    %v519 = vstv %s518
    %v520 = vmul.f32 %v519, %v517
    %v521 = vadd.f32 %v510, %v520
    %s522 = sld [smem:[#allocation2 + $0x2c]]
    %v523 = vstv %s522
    %v524 = vmul.f32 %v523, %v35
    %s525 = sld [smem:[#allocation2 + $0x6c]]
    %v526 = vstv %s525
    %v527 = vadd.f32 %v524, %v526
    %v528 = vmax.f32 %v527, 0.0
    %s529 = sld [smem:[#allocation2 + $0xac]]
    %v530 = vstv %s529
    %v531 = vmul.f32 %v530, %v528
    %v532 = vadd.f32 %v521, %v531
    %s533 = sld [smem:[#allocation2 + $0x2d]]
    %v534 = vstv %s533
    %v535 = vmul.f32 %v534, %v35
    %s536 = sld [smem:[#allocation2 + $0x6d]]
    %v537 = vstv %s536
    %v538 = vadd.f32 %v535, %v537
    %v539 = vmax.f32 %v538, 0.0
    %s540 = sld [smem:[#allocation2 + $0xad]]
    %v541 = vstv %s540
    %v542 = vmul.f32 %v541, %v539
    %v543 = vadd.f32 %v532, %v542
    %s544 = sld [smem:[#allocation2 + $0x2e]]
    %v545 = vstv %s544
    %v546 = vmul.f32 %v545, %v35
    %s547 = sld [smem:[#allocation2 + $0x6e]]
    %v548 = vstv %s547
    %v549 = vadd.f32 %v546, %v548
    %v550 = vmax.f32 %v549, 0.0
    %s551 = sld [smem:[#allocation2 + $0xae]]
    %v552 = vstv %s551
    %v553 = vmul.f32 %v552, %v550
    %v554 = vadd.f32 %v543, %v553
    %s555 = sld [smem:[#allocation2 + $0x2f]]
    %v556 = vstv %s555
    %v557 = vmul.f32 %v556, %v35
    %s558 = sld [smem:[#allocation2 + $0x6f]]
    %v559 = vstv %s558
    %v560 = vadd.f32 %v557, %v559
    %v561 = vmax.f32 %v560, 0.0
    %s562 = sld [smem:[#allocation2 + $0xaf]]
    %v563 = vstv %s562
    %v564 = vmul.f32 %v563, %v561
    %v565 = vadd.f32 %v554, %v564
    %s566 = sld [smem:[#allocation2 + $0x30]]
    %v567 = vstv %s566
    %v568 = vmul.f32 %v567, %v35
    %s569 = sld [smem:[#allocation2 + $0x70]]
    %v570 = vstv %s569
    %v571 = vadd.f32 %v568, %v570
    %v572 = vmax.f32 %v571, 0.0
    %s573 = sld [smem:[#allocation2 + $0xb0]]
    %v574 = vstv %s573
    %v575 = vmul.f32 %v574, %v572
    %v576 = vadd.f32 %v565, %v575
    %s577 = sld [smem:[#allocation2 + $0x31]]
    %v578 = vstv %s577
    %v579 = vmul.f32 %v578, %v35
    %s580 = sld [smem:[#allocation2 + $0x71]]
    %v581 = vstv %s580
    %v582 = vadd.f32 %v579, %v581
    %v583 = vmax.f32 %v582, 0.0
    %s584 = sld [smem:[#allocation2 + $0xb1]]
    %v585 = vstv %s584
    %v586 = vmul.f32 %v585, %v583
    %v587 = vadd.f32 %v576, %v586
    %s588 = sld [smem:[#allocation2 + $0x32]]
    %v589 = vstv %s588
    %v590 = vmul.f32 %v589, %v35
    %s591 = sld [smem:[#allocation2 + $0x72]]
    %v592 = vstv %s591
    %v593 = vadd.f32 %v590, %v592
    %v594 = vmax.f32 %v593, 0.0
    %s595 = sld [smem:[#allocation2 + $0xb2]]
    %v596 = vstv %s595
    %v597 = vmul.f32 %v596, %v594
    %v598 = vadd.f32 %v587, %v597
    %s599 = sld [smem:[#allocation2 + $0x33]]
    %v600 = vstv %s599
    %v601 = vmul.f32 %v600, %v35
    %s602 = sld [smem:[#allocation2 + $0x73]]
    %v603 = vstv %s602
    %v604 = vadd.f32 %v601, %v603
    %v605 = vmax.f32 %v604, 0.0
    %s606 = sld [smem:[#allocation2 + $0xb3]]
    %v607 = vstv %s606
    %v608 = vmul.f32 %v607, %v605
    %v609 = vadd.f32 %v598, %v608
    %s610 = sld [smem:[#allocation2 + $0x34]]
    %v611 = vstv %s610
    %v612 = vmul.f32 %v611, %v35
    %s613 = sld [smem:[#allocation2 + $0x74]]
    %v614 = vstv %s613
    %v615 = vadd.f32 %v612, %v614
    %v616 = vmax.f32 %v615, 0.0
    %s617 = sld [smem:[#allocation2 + $0xb4]]
    %v618 = vstv %s617
    %v619 = vmul.f32 %v618, %v616
    %v620 = vadd.f32 %v609, %v619
    %s621 = sld [smem:[#allocation2 + $0x35]]
    %v622 = vstv %s621
    %v623 = vmul.f32 %v622, %v35
    %s624 = sld [smem:[#allocation2 + $0x75]]
    %v625 = vstv %s624
    %v626 = vadd.f32 %v623, %v625
    %v627 = vmax.f32 %v626, 0.0
    %s628 = sld [smem:[#allocation2 + $0xb5]]
    %v629 = vstv %s628
    %v630 = vmul.f32 %v629, %v627
    %v631 = vadd.f32 %v620, %v630
    %s632 = sld [smem:[#allocation2 + $0x36]]
    %v633 = vstv %s632
    %v634 = vmul.f32 %v633, %v35
    %s635 = sld [smem:[#allocation2 + $0x76]]
    %v636 = vstv %s635
    %v637 = vadd.f32 %v634, %v636
    %v638 = vmax.f32 %v637, 0.0
    %s639 = sld [smem:[#allocation2 + $0xb6]]
    %v640 = vstv %s639
    %v641 = vmul.f32 %v640, %v638
    %v642 = vadd.f32 %v631, %v641
    %s643 = sld [smem:[#allocation2 + $0x37]]
    %v644 = vstv %s643
    %v645 = vmul.f32 %v644, %v35
    %s646 = sld [smem:[#allocation2 + $0x77]]
    %v647 = vstv %s646
    %v648 = vadd.f32 %v645, %v647
    %v649 = vmax.f32 %v648, 0.0
    %s650 = sld [smem:[#allocation2 + $0xb7]]
    %v651 = vstv %s650
    %v652 = vmul.f32 %v651, %v649
    %v653 = vadd.f32 %v642, %v652
    %s654 = sld [smem:[#allocation2 + $0x38]]
    %v655 = vstv %s654
    %v656 = vmul.f32 %v655, %v35
    %s657 = sld [smem:[#allocation2 + $0x78]]
    %v658 = vstv %s657
    %v659 = vadd.f32 %v656, %v658
    %v660 = vmax.f32 %v659, 0.0
    %s661 = sld [smem:[#allocation2 + $0xb8]]
    %v662 = vstv %s661
    %v663 = vmul.f32 %v662, %v660
    %v664 = vadd.f32 %v653, %v663
    %s665 = sld [smem:[#allocation2 + $0x39]]
    %v666 = vstv %s665
    %v667 = vmul.f32 %v666, %v35
    %s668 = sld [smem:[#allocation2 + $0x79]]
    %v669 = vstv %s668
    %v670 = vadd.f32 %v667, %v669
    %v671 = vmax.f32 %v670, 0.0
    %s672 = sld [smem:[#allocation2 + $0xb9]]
    %v673 = vstv %s672
    %v674 = vmul.f32 %v673, %v671
    %v675 = vadd.f32 %v664, %v674
    %s676 = sld [smem:[#allocation2 + $0x3a]]
    %v677 = vstv %s676
    %v678 = vmul.f32 %v677, %v35
    %s679 = sld [smem:[#allocation2 + $0x7a]]
    %v680 = vstv %s679
    %v681 = vadd.f32 %v678, %v680
    %v682 = vmax.f32 %v681, 0.0
    %s683 = sld [smem:[#allocation2 + $0xba]]
    %v684 = vstv %s683
    %v685 = vmul.f32 %v684, %v682
    %v686 = vadd.f32 %v675, %v685
    %s687 = sld [smem:[#allocation2 + $0x3b]]
    %v688 = vstv %s687
    %v689 = vmul.f32 %v688, %v35
    %s690 = sld [smem:[#allocation2 + $0x7b]]
    %v691 = vstv %s690
    %v692 = vadd.f32 %v689, %v691
    %v693 = vmax.f32 %v692, 0.0
    %s694 = sld [smem:[#allocation2 + $0xbb]]
    %v695 = vstv %s694
    %v696 = vmul.f32 %v695, %v693
    %v697 = vadd.f32 %v686, %v696
    %s698 = sld [smem:[#allocation2 + $0x3c]]
    %v699 = vstv %s698
    %v700 = vmul.f32 %v699, %v35
    %s701 = sld [smem:[#allocation2 + $0x7c]]
    %v702 = vstv %s701
    %v703 = vadd.f32 %v700, %v702
    %v704 = vmax.f32 %v703, 0.0
    %s705 = sld [smem:[#allocation2 + $0xbc]]
    %v706 = vstv %s705
    %v707 = vmul.f32 %v706, %v704
    %v708 = vadd.f32 %v697, %v707
    %s709 = sld [smem:[#allocation2 + $0x3d]]
    %v710 = vstv %s709
    %v711 = vmul.f32 %v710, %v35
    %s712 = sld [smem:[#allocation2 + $0x7d]]
    %v713 = vstv %s712
    %v714 = vadd.f32 %v711, %v713
    %v715 = vmax.f32 %v714, 0.0
    %s716 = sld [smem:[#allocation2 + $0xbd]]
    %v717 = vstv %s716
    %v718 = vmul.f32 %v717, %v715
    %v719 = vadd.f32 %v708, %v718
    %s720 = sld [smem:[#allocation2 + $0x3e]]
    %v721 = vstv %s720
    %v722 = vmul.f32 %v721, %v35
    %s723 = sld [smem:[#allocation2 + $0x7e]]
    %v724 = vstv %s723
    %v725 = vadd.f32 %v722, %v724
    %v726 = vmax.f32 %v725, 0.0
    %s727 = sld [smem:[#allocation2 + $0xbe]]
    %v728 = vstv %s727
    %v729 = vmul.f32 %v728, %v726
    %v730 = vadd.f32 %v719, %v729
    %s731 = sld [smem:[#allocation2 + $0x3f]]
    %v732 = vstv %s731
    %v733 = vmul.f32 %v732, %v35
    %s734 = sld [smem:[#allocation2 + $0x7f]]
    %v735 = vstv %s734
    %v736 = vadd.f32 %v733, %v735
    %v737 = vmax.f32 %v736, 0.0
    %s738 = sld [smem:[#allocation2 + $0xbf]]
    %v739 = vstv %s738
    %v740 = vmul.f32 %v739, %v737
    %v741 = vadd.f32 %v730, %v740
    %742 = vst [vmem:[#allocation7] sm:$0xff] %v741
    // Predicated region
    $region18: #{tpu_custom_call.1} parent=1 // pred_check
      _
    $region19: #{tpu_custom_call.1} parent=1 // pred_check_branch
      %744 = sbr.rel (0) target = $region21
    $region20: #{tpu_custom_call.1} parent=1 // pred_region
      %s746 = ssub.s32 128, 128
      %747 = vsyncadd [#allocation4], %s746
      %s749 = sshll.u32 [#allocation7], 4
      %s750 = int_to_ptr.vmem [resolvable:$true] %s749
      %752 = dma.vmem_to_hbm [thread:$0]  %s750, 128, %s2, [#allocation4]
    $region21: #{tpu_custom_call.1} parent=1 // pred_fallthru
      _
    // Predicated region
    $region22: #{tpu_custom_call.1} parent=1 // pred_check
      _
    $region23: #{tpu_custom_call.1} parent=1 // pred_check_branch
      %754 = sbr.rel (0) target = $region25
    $region24: #{tpu_custom_call.1} parent=1 // pred_region
      %755 = dma.done [#allocation4], 128
    $region25: #{tpu_custom_call.1} parent=1 // pred_fallthru
      _
    %756 = vsyncpa [#allocation3], 1
    %757 = vsyncpa [#allocation4], 1
    %758 = vsyncpa [#allocation5], 1

</llo_original>
